<compile_context>
chip_gen: v5e
topology: v5e:2x2
jax: 0.10.0
libtpu: 0.0.40
codegen_flags: <defaults>
</compile_context>

<pallas_src>
import functools

import jax
import jax.numpy as jnp
from jax.experimental import pallas as pl
from jax.experimental.pallas import tpu as pltpu


def _mha_kernel(num_heads, head_dim,
                x_ref, wqkv_ref, bqkv_ref, wo_ref, bo_ref,
                out_ref, attn_ref):
    """One batch element per grid step.

    x_ref:    (1, 3, S, Din)        bf16  stacked [query, key, value]
    wqkv_ref: (3*nh, Din, hd)       bf16  per-head projection weights (q pre-scaled)
    bqkv_ref: (3*nh, 1, hd)         f32   per-head projection biases  (q pre-scaled)
    wo_ref:   (nh, hd, H)           bf16  per-head slices of the output projection
    bo_ref:   (1, H)                f32
    out_ref:  (1, S, H)
    attn_ref: (1, nh, S, S)
    """
    nh = num_heads
    _, n_proj, S, Din = x_ref.shape            # n_proj == 3

    x3 = x_ref[0]                              # (3, S, Din) bf16

    # Broadcast over heads (leading-dim broadcast: no lane/sublane movement),
    # then fuse {q,k,v} x heads into ONE batched MXU einsum with f32 accumulation.
    xb = jnp.broadcast_to(x3[:, None], (n_proj, nh, S, Din))
    xb = xb.reshape(n_proj * nh, S, Din)       # (3*nh, S, Din) bf16

    pro = jnp.einsum("bsd,bde->bse", xb, wqkv_ref[...],
                     preferred_element_type=jnp.float32)      # (3*nh, S, hd) f32
    pro = pro + bqkv_ref[...]                  # bias add (q rows already scaled)
    pro = pro.astype(jnp.bfloat16)             # one cast for all q/k/v heads

    qh = pro[:nh]                              # (nh, S, hd) head-major,
    kh = pro[nh:2 * nh]                        # no transpose / lane slicing needed
    vh = pro[2 * nh:]

    # ---- scores + softmax, batched over all heads at once ----
    scores = jnp.einsum("hqd,hkd->hqk", qh, kh,
                        preferred_element_type=jnp.float32)   # (nh, S, S) f32
    # TODO(synk): optional `mask` argument not implemented (mask=None path).
    m = jnp.max(scores, axis=-1, keepdims=True)
    e = jnp.exp(scores - m)
    denom = jnp.sum(e, axis=-1, keepdims=True)
    w = e / denom                              # exact: output rows sum to 1

    attn_ref[0] = w.astype(attn_ref.dtype)     # whole-slab attention-weight store

    # ---- context + output projection (per-head Wo, summed over heads) ----
    ctx = jnp.einsum("hqk,hkd->hqd", w.astype(jnp.bfloat16), vh,
                     preferred_element_type=jnp.float32)      # (nh, S, hd) f32
    out_h = jnp.einsum("hse,hef->hsf", ctx.astype(jnp.bfloat16), wo_ref[...],
                       preferred_element_type=jnp.float32)    # (nh, S, H) f32
    out = jnp.sum(out_h, axis=0) + bo_ref[...]                # (S, H) f32
    out_ref[0] = out.astype(out_ref.dtype)


def pack_mha_params(params, num_heads, head_dim):
    """Repack torch-layout parameters ONCE (hoisted out of the per-call path)."""
    din = params["wq"].shape[0]
    hidden = num_heads * head_dim
    scale = 1.0 / (float(head_dim) ** 0.5)

    def w_heads(w):      # (Din, H) -> (nh, Din, hd)
        return w.reshape(din, num_heads, head_dim).transpose(1, 0, 2)

    def b_heads(b):      # (1, H) -> (nh, 1, hd)
        return b.reshape(num_heads, 1, head_dim)

    wqkv = jnp.concatenate([w_heads(params["wq"] * scale),   # fold 1/sqrt(hd) into q
                            w_heads(params["wk"]),
                            w_heads(params["wv"])], axis=0)   # (3*nh, Din, hd)
    bqkv = jnp.concatenate([b_heads(params["bq"] * scale),
                            b_heads(params["bk"]),
                            b_heads(params["bv"])], axis=0)   # (3*nh, 1, hd)
    wo = params["wo"].reshape(num_heads, head_dim, hidden)    # (nh, hd, H)
    return {
        "wqkv": wqkv.astype(jnp.bfloat16),
        "bqkv": bqkv.astype(jnp.float32),
        "wo": wo.astype(jnp.bfloat16),
        "bo": params["bo"].astype(jnp.float32),
    }


@functools.partial(jax.jit,
                   static_argnames=("num_heads", "head_dim", "attn_dtype"))
def multi_head_attention(query, key, value, packed, *, num_heads, head_dim,
                         attn_dtype=jnp.float32):
    """query/key/value: (B, S, input_dim) float32.  Returns (output, attn_weights)."""
    B, S, Din = query.shape
    H = num_heads * head_dim

    # One stacked activation tensor -> 1 activation DMA per grid step instead of 3.
    x = jnp.stack([query, key, value], axis=1).astype(jnp.bfloat16)   # (B, 3, S, Din)

    kernel = functools.partial(_mha_kernel, num_heads, head_dim)

    out_shapes = (
        jax.ShapeDtypeStruct((B, S, H), jnp.float32),
        jax.ShapeDtypeStruct((B, num_heads, S, S), attn_dtype),
    )

    # grid=(B,): with B=2 this is two "parallel" steps (one per v7x TensorCore).
    # On single-TC v5e/v6e, folding the whole batch into one step would amortize
    # the ~0.35us per-step overhead.
    return pl.pallas_call(
        kernel,
        out_shape=out_shapes,
        grid_spec=pltpu.PrefetchScalarGridSpec(
            num_scalar_prefetch=0,
            grid=(B,),
            in_specs=[
                pl.BlockSpec((1, 3, S, Din), lambda b: (b, 0, 0, 0)),          # q|k|v
                pl.BlockSpec((3 * num_heads, Din, head_dim), lambda b: (0, 0, 0)),
                pl.BlockSpec((3 * num_heads, 1, head_dim), lambda b: (0, 0, 0)),
                pl.BlockSpec((num_heads, head_dim, H), lambda b: (0, 0, 0)),
                pl.BlockSpec((1, H), lambda b: (0, 0)),
            ],
            out_specs=[
                pl.BlockSpec((1, S, H), lambda b: (b, 0, 0)),
                pl.BlockSpec((1, num_heads, S, S), lambda b: (b, 0, 0, 0)),
            ],
        ),
        compiler_params=pltpu.CompilerParams(
            dimension_semantics=("parallel",),
            vmem_limit_bytes=32 * 1024 * 1024),
    )(x, packed["wqkv"], packed["bqkv"], packed["wo"], packed["bo"])


def mha_reference(query, key, value, params, num_heads, head_dim):
    B, S, _ = query.shape
    H = num_heads * head_dim
    qp = query @ params["wq"] + params["bq"]
    kp = key @ params["wk"] + params["bk"]
    vp = value @ params["wv"] + params["bv"]

    def split(x):
        return x.reshape(B, S, num_heads, head_dim).transpose(0, 2, 1, 3)

    qh, kh, vh = split(qp), split(kp), split(vp)
    scores = jnp.einsum("bhqd,bhkd->bhqk", qh, kh) / jnp.sqrt(jnp.float32(head_dim))
    w = jax.nn.softmax(scores, axis=-1)
    ctx = jnp.einsum("bhqk,bhkd->bhqd", w, vh)
    ctx = ctx.transpose(0, 2, 1, 3).reshape(B, S, H)
    out = ctx @ params["wo"] + params["bo"]
    return out, w


if __name__ == "__main__":
    # Module config (matches the PyTorch __init__ logic):
    input_dim = 32
    hidden_dim = 32
    num_heads = 8
    while input_dim % num_heads != 0:
        num_heads -= 1                      # stays 8 for input_dim=32
    head_dim = hidden_dim // num_heads      # 4

    B, S = 2, 8

    key = jax.random.PRNGKey(0)
    keys = jax.random.split(key, 11)

    # Deterministic synthetic parameters (not a checkpoint load).
    params = {
        "wq": 0.1 * jax.random.normal(keys[0], (input_dim, hidden_dim), jnp.float32),
        "bq": 0.1 * jax.random.normal(keys[1], (1, hidden_dim), jnp.float32),
        "wk": 0.1 * jax.random.normal(keys[2], (input_dim, hidden_dim), jnp.float32),
        "bk": 0.1 * jax.random.normal(keys[3], (1, hidden_dim), jnp.float32),
        "wv": 0.1 * jax.random.normal(keys[4], (input_dim, hidden_dim), jnp.float32),
        "bv": 0.1 * jax.random.normal(keys[5], (1, hidden_dim), jnp.float32),
        "wo": 0.1 * jax.random.normal(keys[6], (hidden_dim, hidden_dim), jnp.float32),
        "bo": 0.1 * jax.random.normal(keys[7], (1, hidden_dim), jnp.float32),
    }

    q = jax.random.normal(keys[8], (B, S, input_dim), jnp.float32)
    k = jax.random.normal(keys[9], (B, S, input_dim), jnp.float32)
    v = jax.random.normal(keys[10], (B, S, input_dim), jnp.float32)

    packed = pack_mha_params(params, num_heads, head_dim)   # one-time packing

    out, attn = multi_head_attention(q, k, v, packed,
                                     num_heads=num_heads, head_dim=head_dim)
    out = jax.block_until_ready(out)
    attn = jax.block_until_ready(attn)

    # Correctness check against a pure-JAX f32 reference of the PyTorch forward.
    # bf16 MXU operands (f32 accumulation) are a deliberate numeric relaxation
    # vs. the f32 PyTorch forward; tolerances reflect that.
    ref_out, ref_attn = mha_reference(q, k, v, params, num_heads, head_dim)
    assert out.shape == (B, S, hidden_dim)
    assert attn.shape == (B, num_heads, S, S)
    assert jnp.allclose(out, ref_out, atol=2e-2, rtol=2e-2)
    assert jnp.allclose(attn, ref_attn, atol=1e-2, rtol=1e-2)

    print("KERNEL_OK")
</pallas_src>

<mosaic_0001>
module attributes {stable_mosaic.version = 11 : i64} {
  func.func @_mha_kernel(%arg0: i32, %arg1: memref<1x3x8x32xbf16, #tpu.memory_space<vmem>>, %arg2: memref<24x32x4xbf16, #tpu.memory_space<vmem>>, %arg3: memref<24x1x4xf32, #tpu.memory_space<vmem>>, %arg4: memref<8x4x32xbf16, #tpu.memory_space<vmem>>, %arg5: memref<1x32xf32, #tpu.memory_space<vmem>>, %arg6: memref<1x8x32xf32, #tpu.memory_space<vmem>>, %arg7: memref<1x8x8x8xf32, #tpu.memory_space<vmem>>) attributes {dimension_semantics = [#tpu.dimension_semantics<parallel>], iteration_bounds = array<i64: 2>, scalar_prefetch = 0 : i64, scratch_operands = 0 : i64, tpu.core_type = #tpu.core_type<tc>, window_params = [{transform_indices = @transform_0, window_bounds = array<i64: 1, 3, 8, 32>}, {pipeline_mode = #tpu.pipeline_mode<synchronous>, transform_indices = @transform_1, window_bounds = array<i64: 24, 32, 4>}, {pipeline_mode = #tpu.pipeline_mode<synchronous>, transform_indices = @transform_2, window_bounds = array<i64: 24, 1, 4>}, {pipeline_mode = #tpu.pipeline_mode<synchronous>, transform_indices = @transform_3, window_bounds = array<i64: 8, 4, 32>}, {pipeline_mode = #tpu.pipeline_mode<synchronous>, transform_indices = @transform_4, window_bounds = array<i64: 1, 32>}, {transform_indices = @transform_5, window_bounds = array<i64: 1, 8, 32>}, {transform_indices = @transform_6, window_bounds = array<i64: 1, 8, 8, 8>}]} {
    %c0 = arith.constant 0 : index
    %c0_0 = arith.constant 0 : index
    %c0_1 = arith.constant 0 : index
    %c0_2 = arith.constant 0 : index
    %0 = vector.load %arg1[%c0, %c0_0, %c0_1, %c0_2] : memref<1x3x8x32xbf16, #tpu.memory_space<vmem>>, vector<1x3x8x32xbf16>
    %1 = vector.shape_cast %0 : vector<1x3x8x32xbf16> to vector<3x8x32xbf16>
    %2 = vector.shape_cast %1 : vector<3x8x32xbf16> to vector<3x1x8x32xbf16>
    %3 = vector.shape_cast %2 : vector<3x1x8x32xbf16> to vector<3x1x8x32xbf16>
    %4 = vector.broadcast %3 : vector<3x1x8x32xbf16> to vector<3x8x8x32xbf16>
    %5 = vector.shape_cast %4 : vector<3x8x8x32xbf16> to vector<24x8x32xbf16>
    %c0_3 = arith.constant 0 : index
    %c0_4 = arith.constant 0 : index
    %c0_5 = arith.constant 0 : index
    %6 = vector.load %arg2[%c0_3, %c0_4, %c0_5] : memref<24x32x4xbf16, #tpu.memory_space<vmem>>, vector<24x32x4xbf16>
    "tpu.trace_start"() <{level = 10 : i32, message = "bsd,bde->bse"}> : () -> ()
    %cst = arith.constant dense<0.000000e+00> : vector<24x8x4xf32>
    %7 = tpu.matmul %5, %6, %cst {dimension_numbers = #tpu.dot_dimension_numbers<[2], [1], [1], [2], [0, 0, 0, 1, 1, 2], [0], [0]>} : vector<24x8x32xbf16>, vector<24x32x4xbf16>, vector<24x8x4xf32> -> vector<24x8x4xf32>
    "tpu.trace_stop"() : () -> ()
    %c0_6 = arith.constant 0 : index
    %c0_7 = arith.constant 0 : index
    %c0_8 = arith.constant 0 : index
    %8 = vector.load %arg3[%c0_6, %c0_7, %c0_8] : memref<24x1x4xf32, #tpu.memory_space<vmem>>, vector<24x1x4xf32>
    %9 = vector.broadcast %8 : vector<24x1x4xf32> to vector<24x8x4xf32>
    %10 = arith.addf %7, %9 : vector<24x8x4xf32>
    %11 = arith.truncf %10 : vector<24x8x4xf32> to vector<24x8x4xbf16>
    %12 = vector.extract_strided_slice %11 {offsets = [0, 0, 0], sizes = [8, 8, 4], strides = [1, 1, 1]} : vector<24x8x4xbf16> to vector<8x8x4xbf16>
    %13 = vector.extract_strided_slice %11 {offsets = [8, 0, 0], sizes = [8, 8, 4], strides = [1, 1, 1]} : vector<24x8x4xbf16> to vector<8x8x4xbf16>
    %14 = vector.extract_strided_slice %11 {offsets = [16, 0, 0], sizes = [8, 8, 4], strides = [1, 1, 1]} : vector<24x8x4xbf16> to vector<8x8x4xbf16>
    "tpu.trace_start"() <{level = 10 : i32, message = "hqd,hkd->hqk"}> : () -> ()
    %cst_9 = arith.constant dense<0.000000e+00> : vector<8x8x8xf32>
    %15 = tpu.matmul %12, %13, %cst_9 {dimension_numbers = #tpu.dot_dimension_numbers<[2], [2], [1], [1], [0, 0, 0, 1, 1, 1], [0], [0]>} : vector<8x8x4xbf16>, vector<8x8x4xbf16>, vector<8x8x8xf32> -> vector<8x8x8xf32>
    "tpu.trace_stop"() : () -> ()
    %cst_10 = arith.constant dense<0xFF800000> : vector<8x8xf32>
    %16 = vector.multi_reduction <maximumf>, %15, %cst_10 [2] : vector<8x8x8xf32> to vector<8x8xf32>
    %17 = vector.shape_cast %16 : vector<8x8xf32> to vector<8x8x1xf32>
    %18 = vector.broadcast %17 : vector<8x8x1xf32> to vector<8x8x8xf32>
    %19 = arith.subf %15, %18 : vector<8x8x8xf32>
    %20 = math.exp %19 : vector<8x8x8xf32>
    %cst_11 = arith.constant dense<0.000000e+00> : vector<8x8xf32>
    %21 = vector.multi_reduction <add>, %20, %cst_11 [2] : vector<8x8x8xf32> to vector<8x8xf32>
    %22 = vector.shape_cast %21 : vector<8x8xf32> to vector<8x8x1xf32>
    %23 = vector.broadcast %22 : vector<8x8x1xf32> to vector<8x8x8xf32>
    %24 = arith.divf %20, %23 : vector<8x8x8xf32>
    %c0_12 = arith.constant 0 : index
    %c0_13 = arith.constant 0 : index
    %c0_14 = arith.constant 0 : index
    %c0_15 = arith.constant 0 : index
    %25 = vector.load %arg7[%c0_12, %c0_13, %c0_14, %c0_15] : memref<1x8x8x8xf32, #tpu.memory_space<vmem>>, vector<1x8x8x8xf32>
    %26 = vector.shape_cast %25 : vector<1x8x8x8xf32> to vector<8x8x8xf32>
    %27 = vector.shape_cast %24 : vector<8x8x8xf32> to vector<1x8x8x8xf32>
    tpu.vector_store %arg7[%c0_12, %c0_13, %c0_14, %c0_15], %27 {strides = array<i32>} : memref<1x8x8x8xf32, #tpu.memory_space<vmem>>, vector<1x8x8x8xf32>,
    %28 = arith.truncf %24 : vector<8x8x8xf32> to vector<8x8x8xbf16>
    "tpu.trace_start"() <{level = 10 : i32, message = "hqk,hkd->hqd"}> : () -> ()
    %cst_16 = arith.constant dense<0.000000e+00> : vector<8x8x4xf32>
    %29 = tpu.matmul %28, %14, %cst_16 {dimension_numbers = #tpu.dot_dimension_numbers<[2], [1], [1], [2], [0, 0, 0, 1, 1, 2], [0], [0]>} : vector<8x8x8xbf16>, vector<8x8x4xbf16>, vector<8x8x4xf32> -> vector<8x8x4xf32>
    "tpu.trace_stop"() : () -> ()
    %30 = arith.truncf %29 : vector<8x8x4xf32> to vector<8x8x4xbf16>
    %c0_17 = arith.constant 0 : index
    %c0_18 = arith.constant 0 : index
    %c0_19 = arith.constant 0 : index
    %31 = vector.load %arg4[%c0_17, %c0_18, %c0_19] : memref<8x4x32xbf16, #tpu.memory_space<vmem>>, vector<8x4x32xbf16>
    "tpu.trace_start"() <{level = 10 : i32, message = "hse,hef->hsf"}> : () -> ()
    %cst_20 = arith.constant dense<0.000000e+00> : vector<8x8x32xf32>
    %32 = tpu.matmul %30, %31, %cst_20 {dimension_numbers = #tpu.dot_dimension_numbers<[2], [1], [1], [2], [0, 0, 0, 1, 1, 2], [0], [0]>} : vector<8x8x4xbf16>, vector<8x4x32xbf16>, vector<8x8x32xf32> -> vector<8x8x32xf32>
    "tpu.trace_stop"() : () -> ()
    %cst_21 = arith.constant dense<0.000000e+00> : vector<8x32xf32>
    %33 = vector.multi_reduction <add>, %32, %cst_21 [0] : vector<8x8x32xf32> to vector<8x32xf32>
    %c0_22 = arith.constant 0 : index
    %c0_23 = arith.constant 0 : index
    %34 = vector.load %arg5[%c0_22, %c0_23] : memref<1x32xf32, #tpu.memory_space<vmem>>, vector<1x32xf32>
    %35 = vector.broadcast %34 : vector<1x32xf32> to vector<8x32xf32>
    %36 = arith.addf %33, %35 : vector<8x32xf32>
    %c0_24 = arith.constant 0 : index
    %c0_25 = arith.constant 0 : index
    %c0_26 = arith.constant 0 : index
    %37 = vector.load %arg6[%c0_24, %c0_25, %c0_26] : memref<1x8x32xf32, #tpu.memory_space<vmem>>, vector<1x8x32xf32>
    %38 = vector.shape_cast %37 : vector<1x8x32xf32> to vector<8x32xf32>
    %39 = vector.shape_cast %36 : vector<8x32xf32> to vector<1x8x32xf32>
    tpu.vector_store %arg6[%c0_24, %c0_25, %c0_26], %39 {strides = array<i32>} : memref<1x8x32xf32, #tpu.memory_space<vmem>>, vector<1x8x32xf32>,
    return
  }
  func.func @transform_0(%arg0: i32) -> (i32, i32, i32, i32) {
    %c0_i32 = arith.constant 0 : i32
    %c0_i32_0 = arith.constant 0 : i32
    %c0_i32_1 = arith.constant 0 : i32
    %c0_i32_2 = arith.constant 0 : i32
    return %arg0, %c0_i32, %c0_i32_0, %c0_i32_1 : i32, i32, i32, i32
  }
  func.func @transform_1(%arg0: i32) -> (i32, i32, i32) {
    %c0_i32 = arith.constant 0 : i32
    %c0_i32_0 = arith.constant 0 : i32
    %c0_i32_1 = arith.constant 0 : i32
    %c0_i32_2 = arith.constant 0 : i32
    return %c0_i32, %c0_i32_0, %c0_i32_1 : i32, i32, i32
  }
  func.func @transform_2(%arg0: i32) -> (i32, i32, i32) {
    %c0_i32 = arith.constant 0 : i32
    %c0_i32_0 = arith.constant 0 : i32
    %c0_i32_1 = arith.constant 0 : i32
    %c0_i32_2 = arith.constant 0 : i32
    return %c0_i32, %c0_i32_0, %c0_i32_1 : i32, i32, i32
  }
  func.func @transform_3(%arg0: i32) -> (i32, i32, i32) {
    %c0_i32 = arith.constant 0 : i32
    %c0_i32_0 = arith.constant 0 : i32
    %c0_i32_1 = arith.constant 0 : i32
    %c0_i32_2 = arith.constant 0 : i32
    return %c0_i32, %c0_i32_0, %c0_i32_1 : i32, i32, i32
  }
  func.func @transform_4(%arg0: i32) -> (i32, i32) {
    %c0_i32 = arith.constant 0 : i32
    %c0_i32_0 = arith.constant 0 : i32
    %c0_i32_1 = arith.constant 0 : i32
    return %c0_i32, %c0_i32_0 : i32, i32
  }
  func.func @transform_5(%arg0: i32) -> (i32, i32, i32) {
    %c0_i32 = arith.constant 0 : i32
    %c0_i32_0 = arith.constant 0 : i32
    %c0_i32_1 = arith.constant 0 : i32
    return %arg0, %c0_i32, %c0_i32_0 : i32, i32, i32
  }
  func.func @transform_6(%arg0: i32) -> (i32, i32, i32, i32) {
    %c0_i32 = arith.constant 0 : i32
    %c0_i32_0 = arith.constant 0 : i32
    %c0_i32_1 = arith.constant 0 : i32
    %c0_i32_2 = arith.constant 0 : i32
    return %arg0, %c0_i32, %c0_i32_0, %c0_i32_1 : i32, i32, i32, i32
  }
}

</mosaic_0001>

<llo_original>
// kernel: multi_head_attention.1
$region0: #{multi_head_attention.1}
  #allocation0 [shape = 'u32[]', space=smem, size = 0x4, offset = 0x4, fixed_abs, tag = 'smem constant byte address 0x4 - core index']
  #allocation1 [shape = 'u32[72,128]{1,0:T(1,128)}', space=vmem, size = 0x9000, scoped, tag = 'internal scratch']
  %s0 = inlined_call_operand.vmem [shape: bf16[2,3,8,32], index: 0, kind: input, shape index: {}]
  %s1 = inlined_call_operand.vmem [shape: bf16[24,32,4], index: 1, kind: input, shape index: {}]
  %s2 = inlined_call_operand.vmem [shape: f32[24,1,4], index: 2, kind: input, shape index: {}]
  %s3 = inlined_call_operand.vmem [shape: bf16[8,4,32], index: 3, kind: input, shape index: {}]
  %s4 = inlined_call_operand.vmem [shape: f32[1,32], index: 4, kind: input, shape index: {}]
  %s5 = inlined_call_operand.hbm [shape: f32[2,8,32], index: 5, kind: output, shape index: {0}]
  %s6 = inlined_call_operand.hbm [shape: f32[2,8,8,8], index: 6, kind: output, shape index: {1}]
  %7 = xla_tuple %s5, %s6
  %s8 = sld [smem:[#allocation0]]
  $region61: #{multi_head_attention.1} parent=0
    _
  %s10 = ssub.s32 1, %s8
  %s11 = scalar_select 0, %s10, %s8
  $region1: #{multi_head_attention.1} parent=0
    #allocation2 [shape = 'u8[8192]{0}', space=vmem, size = 0x2000, scoped, tag = 'output window, operand 0']
    #allocation3 [shape = 's32[2]{0}', space=sflag, size = 0x8, scoped, tag = 'scoped memory for multi_head_attention.1']
    #allocation4 [shape = 'u8[65536]{0}', space=vmem, size = 0x10000, scoped, tag = 'output window, operand 1']
    #allocation5 [shape = 's32[2]{0}', space=sflag, size = 0x8, scoped, tag = 'scoped memory for multi_head_attention.1']
    %12 = vsyncpa [#allocation3], 0
    %s13 = scalar_lea.sflag [#allocation3], 1
    %14 = vsyncpa %s13, 0
    %15 = vsyncpa [#allocation5], 0
    %s16 = scalar_lea.sflag [#allocation5], 1
    %17 = vsyncpa %s16, 0
    loop: start=0, step=1, limit=4
    $region2: #{multi_head_attention.1} parent=1 // loop_pre_header
      _
    $region3: #{multi_head_attention.1} parent=1 // loop_header
      %s19 = sphi 0, %s23
      %p20 = scmp.ge.s32.totalorder %s19, 4
      %s29 = sphi 0, %s31
      %s32 = sphi 0, %s29
      %s33 = sphi 0, %s32
      %s49 = sphi 0, %s33
      %s53 = sphi 0, %s53
      %s55 = sphi 0, %s53
      %s56 = sphi 0, %s55
      %s70 = sphi 0, %s56
      %s74 = sphi 0, %s74
      %s76 = sphi 0, %s74
      %s77 = sphi 0, %s76
      %s91 = sphi 0, %s77
      %s95 = sphi 0, %s95
      %s97 = sphi 0, %s95
      %s98 = sphi 0, %s97
      %s112 = sphi 0, %s98
      %s116 = sphi 0, %s116
      %s118 = sphi 0, %s116
      %s119 = sphi 0, %s118
      %s133 = sphi 0, %s119
      %s139 = sphi 0, %s141
      %s142 = sphi 0, %s139
      %s143 = sphi 0, %s142
      %s159 = sphi 0, %s143
      %s165 = sphi 0, %s167
      %s168 = sphi 0, %s165
      %s169 = sphi 0, %s168
      %s185 = sphi 0, %s169
    $region4: #{multi_head_attention.1} parent=1 // loop_header_branch
      %22 = sbr.rel (%p20) target = $region8
    $region5: #{multi_head_attention.1} parent=1 // loop_body
      %s24 = ssub.s32 %s19, 1
      %s25 = ssub.s32 %s19, 2
      %s26 = sadd.s32 %s19, 1
      %s27 = ssub.s32 %s19, %s26
      %p28 = scmp.eq.s32.totalorder %s27, 0
      %s30 = sadd.s32 %s29, 1
      %s31 = scalar_select %p28, %s29, %s30
      %p34 = pneg %p28
      %p35 = scmp.eq.s32.totalorder %s19, 1
      %p36 = por %p34, %p35
      %p37 = scmp.ne.s32.totalorder %s29, %s32
      %p38 = scmp.eq.s32.totalorder %s19, 0
      %p39 = por %p37, %p38
      %p40 = scmp.ne.s32.totalorder %s29, %s32
      %p41 = scmp.eq.s32.totalorder %s24, 1
      %p42 = por %p40, %p41
      %p43 = scmp.ne.s32.totalorder %s32, %s33
      %p44 = scmp.eq.s32.totalorder %s24, 0
      %p45 = por %p43, %p44
      %p46 = scmp.ne.s32.totalorder %s32, %s33
      %p47 = scmp.eq.s32.totalorder %s25, 1
      %p48 = por %p46, %p47
      %p50 = scmp.ne.s32.totalorder %s33, %s49
      %p51 = scmp.eq.s32.totalorder %s25, 0
      %p52 = por %p50, %p51
      %s54 = sadd.s32 %s53, 1
      %p57 = scmp.eq.s32.totalorder %s19, 1
      %p58 = scmp.ne.s32.totalorder %s53, %s55
      %p59 = scmp.eq.s32.totalorder %s19, 0
      %p60 = por %p58, %p59
      %p61 = scmp.ne.s32.totalorder %s53, %s55
      %p62 = scmp.eq.s32.totalorder %s24, 1
      %p63 = por %p61, %p62
      %p64 = scmp.ne.s32.totalorder %s55, %s56
      %p65 = scmp.eq.s32.totalorder %s24, 0
      %p66 = por %p64, %p65
      %p67 = scmp.ne.s32.totalorder %s55, %s56
      %p68 = scmp.eq.s32.totalorder %s25, 1
      %p69 = por %p67, %p68
      %p71 = scmp.ne.s32.totalorder %s56, %s70
      %p72 = scmp.eq.s32.totalorder %s25, 0
      %p73 = por %p71, %p72
      %s75 = sadd.s32 %s74, 1
      %p78 = scmp.eq.s32.totalorder %s19, 1
      %p79 = scmp.ne.s32.totalorder %s74, %s76
      %p80 = scmp.eq.s32.totalorder %s19, 0
      %p81 = por %p79, %p80
      %p82 = scmp.ne.s32.totalorder %s74, %s76
      %p83 = scmp.eq.s32.totalorder %s24, 1
      %p84 = por %p82, %p83
      %p85 = scmp.ne.s32.totalorder %s76, %s77
      %p86 = scmp.eq.s32.totalorder %s24, 0
      %p87 = por %p85, %p86
      %p88 = scmp.ne.s32.totalorder %s76, %s77
      %p89 = scmp.eq.s32.totalorder %s25, 1
      %p90 = por %p88, %p89
      %p92 = scmp.ne.s32.totalorder %s77, %s91
      %p93 = scmp.eq.s32.totalorder %s25, 0
      %p94 = por %p92, %p93
      %s96 = sadd.s32 %s95, 1
      %p99 = scmp.eq.s32.totalorder %s19, 1
      %p100 = scmp.ne.s32.totalorder %s95, %s97
      %p101 = scmp.eq.s32.totalorder %s19, 0
      %p102 = por %p100, %p101
      %p103 = scmp.ne.s32.totalorder %s95, %s97
      %p104 = scmp.eq.s32.totalorder %s24, 1
      %p105 = por %p103, %p104
      %p106 = scmp.ne.s32.totalorder %s97, %s98
      %p107 = scmp.eq.s32.totalorder %s24, 0
      %p108 = por %p106, %p107
      %p109 = scmp.ne.s32.totalorder %s97, %s98
      %p110 = scmp.eq.s32.totalorder %s25, 1
      %p111 = por %p109, %p110
      %p113 = scmp.ne.s32.totalorder %s98, %s112
      %p114 = scmp.eq.s32.totalorder %s25, 0
      %p115 = por %p113, %p114
      %s117 = sadd.s32 %s116, 1
      %p120 = scmp.eq.s32.totalorder %s19, 1
      %p121 = scmp.ne.s32.totalorder %s116, %s118
      %p122 = scmp.eq.s32.totalorder %s19, 0
      %p123 = por %p121, %p122
      %p124 = scmp.ne.s32.totalorder %s116, %s118
      %p125 = scmp.eq.s32.totalorder %s24, 1
      %p126 = por %p124, %p125
      %p127 = scmp.ne.s32.totalorder %s118, %s119
      %p128 = scmp.eq.s32.totalorder %s24, 0
      %p129 = por %p127, %p128
      %p130 = scmp.ne.s32.totalorder %s118, %s119
      %p131 = scmp.eq.s32.totalorder %s25, 1
      %p132 = por %p130, %p131
      %p134 = scmp.ne.s32.totalorder %s119, %s133
      %p135 = scmp.eq.s32.totalorder %s25, 0
      %p136 = por %p134, %p135
      %s137 = ssub.s32 %s19, %s26
      %p138 = scmp.eq.s32.totalorder %s137, 0
      %s140 = sadd.s32 %s139, 1
      %s141 = scalar_select %p138, %s139, %s140
      %p144 = pneg %p138
      %p145 = scmp.eq.s32.totalorder %s19, 1
      %p146 = por %p144, %p145
      %p147 = scmp.ne.s32.totalorder %s139, %s142
      %p148 = scmp.eq.s32.totalorder %s19, 0
      %p149 = por %p147, %p148
      %p150 = scmp.ne.s32.totalorder %s139, %s142
      %p151 = scmp.eq.s32.totalorder %s24, 1
      %p152 = por %p150, %p151
      %p153 = scmp.ne.s32.totalorder %s142, %s143
      %p154 = scmp.eq.s32.totalorder %s24, 0
      %p155 = por %p153, %p154
      %p156 = scmp.ne.s32.totalorder %s142, %s143
      %p157 = scmp.eq.s32.totalorder %s25, 1
      %p158 = por %p156, %p157
      %p160 = scmp.ne.s32.totalorder %s143, %s159
      %p161 = scmp.eq.s32.totalorder %s25, 0
      %p162 = por %p160, %p161
      %s163 = ssub.s32 %s19, %s26
      %p164 = scmp.eq.s32.totalorder %s163, 0
      %s166 = sadd.s32 %s165, 1
      %s167 = scalar_select %p164, %s165, %s166
      %p170 = pneg %p164
      %p171 = scmp.eq.s32.totalorder %s19, 1
      %p172 = por %p170, %p171
      %p173 = scmp.ne.s32.totalorder %s165, %s168
      %p174 = scmp.eq.s32.totalorder %s19, 0
      %p175 = por %p173, %p174
      %p176 = scmp.ne.s32.totalorder %s165, %s168
      %p177 = scmp.eq.s32.totalorder %s24, 1
      %p178 = por %p176, %p177
      %p179 = scmp.ne.s32.totalorder %s168, %s169
      %p180 = scmp.eq.s32.totalorder %s24, 0
      %p181 = por %p179, %p180
      %p182 = scmp.ne.s32.totalorder %s168, %s169
      %p183 = scmp.eq.s32.totalorder %s25, 1
      %p184 = por %p182, %p183
      %p186 = scmp.ne.s32.totalorder %s169, %s185
      %p187 = scmp.eq.s32.totalorder %s25, 0
      %p188 = por %p186, %p187
      %p189 = scmp.le.s32.totalorder 1, %s19
      %p190 = scmp.lt.s32.totalorder %s19, 3
      %p191 = pnand %p189, %p190
      %p192 = pneg %p191
      // Predicated region
      $region9: #{multi_head_attention.1} parent=5 // pred_check
        _
      $region10: #{multi_head_attention.1} parent=5 // pred_check_branch
        %194 = sbr.rel (%p191) target = $region12
      $region11: #{multi_head_attention.1} parent=5 // pred_region
        %s195 = ssub.s32 %s19, 1
        // Predicated region
        $region13: #{multi_head_attention.1} parent=11 // pred_check
          %p196 = pneg %p66
        $region14: #{multi_head_attention.1} parent=11 // pred_check_branch
          %198 = sbr.rel (%p196) target = $region16
        $region15: #{multi_head_attention.1} parent=11 // pred_region
          _
        $region16: #{multi_head_attention.1} parent=11 // pred_fallthru
          _
        // Predicated region
        $region17: #{multi_head_attention.1} parent=11 // pred_check
          %p199 = pneg %p87
        $region18: #{multi_head_attention.1} parent=11 // pred_check_branch
          %201 = sbr.rel (%p199) target = $region20
        $region19: #{multi_head_attention.1} parent=11 // pred_region
          _
        $region20: #{multi_head_attention.1} parent=11 // pred_fallthru
          _
        // Predicated region
        $region21: #{multi_head_attention.1} parent=11 // pred_check
          %p202 = pneg %p108
        $region22: #{multi_head_attention.1} parent=11 // pred_check_branch
          %204 = sbr.rel (%p202) target = $region24
        $region23: #{multi_head_attention.1} parent=11 // pred_region
          _
        $region24: #{multi_head_attention.1} parent=11 // pred_fallthru
          _
        // Predicated region
        $region25: #{multi_head_attention.1} parent=11 // pred_check
          %p205 = pneg %p129
        $region26: #{multi_head_attention.1} parent=11 // pred_check_branch
          %207 = sbr.rel (%p205) target = $region28
        $region27: #{multi_head_attention.1} parent=11 // pred_region
          _
        $region28: #{multi_head_attention.1} parent=11 // pred_fallthru
          _
      $region12: #{multi_head_attention.1} parent=5 // pred_fallthru
        _
      %p208 = scmp.lt.s32.totalorder %s19, 2
      // Predicated region
      $region29: #{multi_head_attention.1} parent=5 // pred_check
        %p209 = pneg %p208
      $region30: #{multi_head_attention.1} parent=5 // pred_check_branch
        %211 = sbr.rel (%p209) target = $region32
      $region31: #{multi_head_attention.1} parent=5 // pred_region
        // Predicated region
        $region33: #{multi_head_attention.1} parent=31 // pred_check
          %p212 = pneg %p39
        $region34: #{multi_head_attention.1} parent=31 // pred_check_branch
          %214 = sbr.rel (%p212) target = $region36
        $region35: #{multi_head_attention.1} parent=31 // pred_region
          %p215 = scmp.lt.s32.totalorder %s19, 1
          %s216 = scalar_select %p215, %s19, 1
          %s217 = smul.addr %s216, 3
          %s218 = smul.addr %s217, 4
          %s219 = scalar_lea.vmem %s0, %s218
        $region36: #{multi_head_attention.1} parent=31 // pred_fallthru
          _
      $region32: #{multi_head_attention.1} parent=5 // pred_fallthru
        _
      %p220 = scmp.le.s32.totalorder 1, %s19
      %p221 = scmp.lt.s32.totalorder %s19, 3
      %p222 = pnand %p220, %p221
      %p223 = pneg %p222
      // Predicated region
      $region37: #{multi_head_attention.1} parent=5 // pred_check
        _
      $region38: #{multi_head_attention.1} parent=5 // pred_check_branch
        %225 = sbr.rel (%p222) target = $region40
      $region39: #{multi_head_attention.1} parent=5 // pred_region
        %s226 = ssub.s32 %s19, 1
        %p227 = scmp.lt.s32.totalorder %s24, 1
        %s228 = scalar_select %p227, %s24, 1
        %s229 = smul.addr %s228, 3
        %s230 = smul.addr %s229, 4
        %s231 = scalar_lea.vmem %s0, %s230
        %p232 = pneg %p45
        %p233 = pneg %p42
        %p234 = pneg %p66
        %p235 = pneg %p63
        %p236 = pneg %p87
        %p237 = pneg %p84
        %p238 = pneg %p108
        %p239 = pneg %p105
        %p240 = pneg %p129
        %p241 = pneg %p126
        %p242 = pneg %p155
        %p243 = pneg %p152
        %s244 = sand.u32 %s142, 1
        %s245 = scalar_lea.sflag [#allocation3], %s244
        %s246 = sand.u32 %s142, 1
        %s247 = smul.addr %s246, 8
        %s248 = scalar_lea.vmem [#allocation2], %s247
        %p249 = pneg %p181
        %p250 = pneg %p178
        %s251 = sand.u32 %s168, 1
        %s252 = scalar_lea.sflag [#allocation5], %s251
        %s253 = sand.u32 %s168, 1
        %s254 = smul.addr %s253, 64
        %s255 = scalar_lea.vmem [#allocation4], %s254
        %p256 = scmp.lt.s32.totalorder %s24, 1
        %s257 = scalar_select %p256, %s24, 1
        %s258 = smul.addr %s257, 3
        %s259 = smul.addr %s258, 4
        %s260 = scalar_lea.vmem %s0, %s259
        %v262 = vld [vmem:[%s260] sm:$0xf]
        %v263 = vld [vmem:[%s260 + $0x4] sm:$0xf]
        %v264 = vld [vmem:[%s260 + $0x8] sm:$0xf]
        %v265 = vld [vmem:[%s1] sm:$0xf]
        %v266 = vld [vmem:[%s1 + $0x4] sm:$0xf]
        %v267 = vld [vmem:[%s1 + $0x8] sm:$0xf]
        %v268 = vld [vmem:[%s1 + $0xc] sm:$0xf]
        %v269 = vld [vmem:[%s1 + $0x10] sm:$0xf]
        %v270 = vld [vmem:[%s1 + $0x14] sm:$0xf]
        %v271 = vld [vmem:[%s1 + $0x18] sm:$0xf]
        %v272 = vld [vmem:[%s1 + $0x1c] sm:$0xf]
        %v273 = vld [vmem:[%s1 + $0x20] sm:$0xf]
        %v274 = vld [vmem:[%s1 + $0x24] sm:$0xf]
        %v275 = vld [vmem:[%s1 + $0x28] sm:$0xf]
        %v276 = vld [vmem:[%s1 + $0x2c] sm:$0xf]
        %v277 = vld [vmem:[%s1 + $0x30] sm:$0xf]
        %v278 = vld [vmem:[%s1 + $0x34] sm:$0xf]
        %v279 = vld [vmem:[%s1 + $0x38] sm:$0xf]
        %v280 = vld [vmem:[%s1 + $0x3c] sm:$0xf]
        %v281 = vld [vmem:[%s1 + $0x40] sm:$0xf]
        %v282 = vld [vmem:[%s1 + $0x44] sm:$0xf]
        %v283 = vld [vmem:[%s1 + $0x48] sm:$0xf]
        %v284 = vld [vmem:[%s1 + $0x4c] sm:$0xf]
        %v285 = vld [vmem:[%s1 + $0x50] sm:$0xf]
        %v286 = vld [vmem:[%s1 + $0x54] sm:$0xf]
        %v287 = vld [vmem:[%s1 + $0x58] sm:$0xf]
        %v288 = vld [vmem:[%s1 + $0x5c] sm:$0xf]
        %v289 = vld [vmem:[%s1 + $0x60] sm:$0xf]
        %v290 = vld [vmem:[%s1 + $0x64] sm:$0xf]
        %v291 = vld [vmem:[%s1 + $0x68] sm:$0xf]
        %v292 = vld [vmem:[%s1 + $0x6c] sm:$0xf]
        %v293 = vld [vmem:[%s1 + $0x70] sm:$0xf]
        %v294 = vld [vmem:[%s1 + $0x74] sm:$0xf]
        %v295 = vld [vmem:[%s1 + $0x78] sm:$0xf]
        %v296 = vld [vmem:[%s1 + $0x7c] sm:$0xf]
        %v297 = vld [vmem:[%s1 + $0x80] sm:$0xf]
        %v298 = vld [vmem:[%s1 + $0x84] sm:$0xf]
        %v299 = vld [vmem:[%s1 + $0x88] sm:$0xf]
        %v300 = vld [vmem:[%s1 + $0x8c] sm:$0xf]
        %v301 = vld [vmem:[%s1 + $0x90] sm:$0xf]
        %v302 = vld [vmem:[%s1 + $0x94] sm:$0xf]
        %v303 = vld [vmem:[%s1 + $0x98] sm:$0xf]
        %v304 = vld [vmem:[%s1 + $0x9c] sm:$0xf]
        %v305 = vld [vmem:[%s1 + $0xa0] sm:$0xf]
        %v306 = vld [vmem:[%s1 + $0xa4] sm:$0xf]
        %v307 = vld [vmem:[%s1 + $0xa8] sm:$0xf]
        %v308 = vld [vmem:[%s1 + $0xac] sm:$0xf]
        %v309 = vld [vmem:[%s1 + $0xb0] sm:$0xf]
        %v310 = vld [vmem:[%s1 + $0xb4] sm:$0xf]
        %v311 = vld [vmem:[%s1 + $0xb8] sm:$0xf]
        %v312 = vld [vmem:[%s1 + $0xbc] sm:$0xf]
        %v313 = vld [vmem:[%s1 + $0xc0] sm:$0xf]
        %v314 = vld [vmem:[%s1 + $0xc4] sm:$0xf]
        %v315 = vld [vmem:[%s1 + $0xc8] sm:$0xf]
        %v316 = vld [vmem:[%s1 + $0xcc] sm:$0xf]
        %v317 = vld [vmem:[%s1 + $0xd0] sm:$0xf]
        %v318 = vld [vmem:[%s1 + $0xd4] sm:$0xf]
        %v319 = vld [vmem:[%s1 + $0xd8] sm:$0xf]
        %v320 = vld [vmem:[%s1 + $0xdc] sm:$0xf]
        %v321 = vld [vmem:[%s1 + $0xe0] sm:$0xf]
        %v322 = vld [vmem:[%s1 + $0xe4] sm:$0xf]
        %v323 = vld [vmem:[%s1 + $0xe8] sm:$0xf]
        %v324 = vld [vmem:[%s1 + $0xec] sm:$0xf]
        %v325 = vld [vmem:[%s1 + $0xf0] sm:$0xf]
        %v326 = vld [vmem:[%s1 + $0xf4] sm:$0xf]
        %v327 = vld [vmem:[%s1 + $0xf8] sm:$0xf]
        %v328 = vld [vmem:[%s1 + $0xfc] sm:$0xf]
        %v329 = vld [vmem:[%s1 + $0x100] sm:$0xf]
        %v330 = vld [vmem:[%s1 + $0x104] sm:$0xf]
        %v331 = vld [vmem:[%s1 + $0x108] sm:$0xf]
        %v332 = vld [vmem:[%s1 + $0x10c] sm:$0xf]
        %v333 = vld [vmem:[%s1 + $0x110] sm:$0xf]
        %v334 = vld [vmem:[%s1 + $0x114] sm:$0xf]
        %v335 = vld [vmem:[%s1 + $0x118] sm:$0xf]
        %v336 = vld [vmem:[%s1 + $0x11c] sm:$0xf]
        %v337 = vld [vmem:[%s1 + $0x120] sm:$0xf]
        %v338 = vld [vmem:[%s1 + $0x124] sm:$0xf]
        %v339 = vld [vmem:[%s1 + $0x128] sm:$0xf]
        %v340 = vld [vmem:[%s1 + $0x12c] sm:$0xf]
        %v341 = vld [vmem:[%s1 + $0x130] sm:$0xf]
        %v342 = vld [vmem:[%s1 + $0x134] sm:$0xf]
        %v343 = vld [vmem:[%s1 + $0x138] sm:$0xf]
        %v344 = vld [vmem:[%s1 + $0x13c] sm:$0xf]
        %v345 = vld [vmem:[%s1 + $0x140] sm:$0xf]
        %v346 = vld [vmem:[%s1 + $0x144] sm:$0xf]
        %v347 = vld [vmem:[%s1 + $0x148] sm:$0xf]
        %v348 = vld [vmem:[%s1 + $0x14c] sm:$0xf]
        %v349 = vld [vmem:[%s1 + $0x150] sm:$0xf]
        %v350 = vld [vmem:[%s1 + $0x154] sm:$0xf]
        %v351 = vld [vmem:[%s1 + $0x158] sm:$0xf]
        %v352 = vld [vmem:[%s1 + $0x15c] sm:$0xf]
        %v353 = vld [vmem:[%s1 + $0x160] sm:$0xf]
        %v354 = vld [vmem:[%s1 + $0x164] sm:$0xf]
        %v355 = vld [vmem:[%s1 + $0x168] sm:$0xf]
        %v356 = vld [vmem:[%s1 + $0x16c] sm:$0xf]
        %v357 = vld [vmem:[%s1 + $0x170] sm:$0xf]
        %v358 = vld [vmem:[%s1 + $0x174] sm:$0xf]
        %v359 = vld [vmem:[%s1 + $0x178] sm:$0xf]
        %v360 = vld [vmem:[%s1 + $0x17c] sm:$0xf]
        %v361 = vld [vmem:[%s2] sm:$0x1]
        %v362 = vld [vmem:[%s2 + $0x1] sm:$0x1]
        %v363 = vld [vmem:[%s2 + $0x2] sm:$0x1]
        %v364 = vld [vmem:[%s2 + $0x3] sm:$0x1]
        %v365 = vld [vmem:[%s2 + $0x4] sm:$0x1]
        %v366 = vld [vmem:[%s2 + $0x5] sm:$0x1]
        %v367 = vld [vmem:[%s2 + $0x6] sm:$0x1]
        %v368 = vld [vmem:[%s2 + $0x7] sm:$0x1]
        %v369 = vld [vmem:[%s2 + $0x8] sm:$0x1]
        %v370 = vld [vmem:[%s2 + $0x9] sm:$0x1]
        %v371 = vld [vmem:[%s2 + $0xa] sm:$0x1]
        %v372 = vld [vmem:[%s2 + $0xb] sm:$0x1]
        %v373 = vld [vmem:[%s2 + $0xc] sm:$0x1]
        %v374 = vld [vmem:[%s2 + $0xd] sm:$0x1]
        %v375 = vld [vmem:[%s2 + $0xe] sm:$0x1]
        %v376 = vld [vmem:[%s2 + $0xf] sm:$0x1]
        %v377 = vld [vmem:[%s2 + $0x10] sm:$0x1]
        %v378 = vld [vmem:[%s2 + $0x11] sm:$0x1]
        %v379 = vld [vmem:[%s2 + $0x12] sm:$0x1]
        %v380 = vld [vmem:[%s2 + $0x13] sm:$0x1]
        %v381 = vld [vmem:[%s2 + $0x14] sm:$0x1]
        %v382 = vld [vmem:[%s2 + $0x15] sm:$0x1]
        %v383 = vld [vmem:[%s2 + $0x16] sm:$0x1]
        %v384 = vld [vmem:[%s2 + $0x17] sm:$0x1]
        %v409 = vperm.slane %v361, 0
        %v410 = vperm.slane %v362, 0
        %v411 = vperm.slane %v363, 0
        %v412 = vperm.slane %v364, 0
        %v413 = vperm.slane %v365, 0
        %v414 = vperm.slane %v366, 0
        %v415 = vperm.slane %v367, 0
        %v416 = vperm.slane %v368, 0
        %v417 = vperm.slane %v369, 0
        %v418 = vperm.slane %v370, 0
        %v419 = vperm.slane %v371, 0
        %v420 = vperm.slane %v372, 0
        %v421 = vperm.slane %v373, 0
        %v422 = vperm.slane %v374, 0
        %v423 = vperm.slane %v375, 0
        %v424 = vperm.slane %v376, 0
        %v425 = vperm.slane %v377, 0
        %v426 = vperm.slane %v378, 0
        %v427 = vperm.slane %v379, 0
        %v428 = vperm.slane %v380, 0
        %v429 = vperm.slane %v381, 0
        %v430 = vperm.slane %v382, 0
        %v431 = vperm.slane %v383, 0
        %v432 = vperm.slane %v384, 0
        %v461 = vunpack.c.l.b16 %v265
        %v462 = vunpack.c.l.b16 %v266
        %v463 = vunpack.c.l.b16 %v267
        %v464 = vunpack.c.l.b16 %v268
        %v465 = vpack.c.b16 %v462, %v461
        %v466 = vpack.c.b16 %v464, %v463
        %vm469 = vcmask 261120
        %v471 = vsel %vm469, %v262, 0
        %473 = vmatpush.bf16.msra.mxu0 0
        %474 = vmatpush.bf16.msra.mxu0 0
        %475 = vmatpush.bf16.msra.mxu0 0
        %476 = vmatpush.bf16.msra.mxu0 0
        %477 = vmatpush.bf16.msra.mxu0 0
        %478 = vmatpush.bf16.msra.mxu0 0
        %479 = vmatpush.bf16.msra.mxu0 %v466
        %480 = vmatpush.bf16.msra.mxu0 %v465
        %481 = vmatmul.bf16.gmra.mxu0 %v471
        %v482 = vpop.f32.mrf.mxu0
        %v483 = vadd.f32 %v409, %v482
        %v484 = vpop.f32.mrf.mxu0
        %485 = vdwg.mxu0
        %v490 = vunpack.c.l.b16 %v269
        %v491 = vunpack.c.l.b16 %v270
        %v492 = vunpack.c.l.b16 %v271
        %v493 = vunpack.c.l.b16 %v272
        %v494 = vpack.c.b16 %v491, %v490
        %v495 = vpack.c.b16 %v493, %v492
        %498 = vmatpush.bf16.msra.mxu0 0
        %499 = vmatpush.bf16.msra.mxu0 0
        %500 = vmatpush.bf16.msra.mxu0 0
        %501 = vmatpush.bf16.msra.mxu0 0
        %502 = vmatpush.bf16.msra.mxu0 0
        %503 = vmatpush.bf16.msra.mxu0 0
        %504 = vmatpush.bf16.msra.mxu0 %v495
        %505 = vmatpush.bf16.msra.mxu0 %v494
        %506 = vmatmul.bf16.gmra.mxu0 %v471
        %v507 = vpop.f32.mrf.mxu0
        %v508 = vadd.f32 %v410, %v507
        %v509 = vpop.f32.mrf.mxu0
        %510 = vdwg.mxu0
        %v515 = vunpack.c.l.b16 %v273
        %v516 = vunpack.c.l.b16 %v274
        %v517 = vunpack.c.l.b16 %v275
        %v518 = vunpack.c.l.b16 %v276
        %v519 = vpack.c.b16 %v516, %v515
        %v520 = vpack.c.b16 %v518, %v517
        %523 = vmatpush.bf16.msra.mxu0 0
        %524 = vmatpush.bf16.msra.mxu0 0
        %525 = vmatpush.bf16.msra.mxu0 0
        %526 = vmatpush.bf16.msra.mxu0 0
        %527 = vmatpush.bf16.msra.mxu0 0
        %528 = vmatpush.bf16.msra.mxu0 0
        %529 = vmatpush.bf16.msra.mxu0 %v520
        %530 = vmatpush.bf16.msra.mxu0 %v519
        %531 = vmatmul.bf16.gmra.mxu0 %v471
        %v532 = vpop.f32.mrf.mxu0
        %v533 = vadd.f32 %v411, %v532
        %v534 = vpop.f32.mrf.mxu0
        %535 = vdwg.mxu0
        %v540 = vunpack.c.l.b16 %v277
        %v541 = vunpack.c.l.b16 %v278
        %v542 = vunpack.c.l.b16 %v279
        %v543 = vunpack.c.l.b16 %v280
        %v544 = vpack.c.b16 %v541, %v540
        %v545 = vpack.c.b16 %v543, %v542
        %548 = vmatpush.bf16.msra.mxu0 0
        %549 = vmatpush.bf16.msra.mxu0 0
        %550 = vmatpush.bf16.msra.mxu0 0
        %551 = vmatpush.bf16.msra.mxu0 0
        %552 = vmatpush.bf16.msra.mxu0 0
        %553 = vmatpush.bf16.msra.mxu0 0
        %554 = vmatpush.bf16.msra.mxu0 %v545
        %555 = vmatpush.bf16.msra.mxu0 %v544
        %556 = vmatmul.bf16.gmra.mxu0 %v471
        %v557 = vpop.f32.mrf.mxu0
        %v558 = vadd.f32 %v412, %v557
        %v559 = vpop.f32.mrf.mxu0
        %560 = vdwg.mxu0
        %v565 = vunpack.c.l.b16 %v281
        %v566 = vunpack.c.l.b16 %v282
        %v567 = vunpack.c.l.b16 %v283
        %v568 = vunpack.c.l.b16 %v284
        %v569 = vpack.c.b16 %v566, %v565
        %v570 = vpack.c.b16 %v568, %v567
        %573 = vmatpush.bf16.msra.mxu0 0
        %574 = vmatpush.bf16.msra.mxu0 0
        %575 = vmatpush.bf16.msra.mxu0 0
        %576 = vmatpush.bf16.msra.mxu0 0
        %577 = vmatpush.bf16.msra.mxu0 0
        %578 = vmatpush.bf16.msra.mxu0 0
        %579 = vmatpush.bf16.msra.mxu0 %v570
        %580 = vmatpush.bf16.msra.mxu0 %v569
        %581 = vmatmul.bf16.gmra.mxu0 %v471
        %v582 = vpop.f32.mrf.mxu0
        %v583 = vadd.f32 %v413, %v582
        %v584 = vpop.f32.mrf.mxu0
        %585 = vdwg.mxu0
        %v590 = vunpack.c.l.b16 %v285
        %v591 = vunpack.c.l.b16 %v286
        %v592 = vunpack.c.l.b16 %v287
        %v593 = vunpack.c.l.b16 %v288
        %v594 = vpack.c.b16 %v591, %v590
        %v595 = vpack.c.b16 %v593, %v592
        %598 = vmatpush.bf16.msra.mxu0 0
        %599 = vmatpush.bf16.msra.mxu0 0
        %600 = vmatpush.bf16.msra.mxu0 0
        %601 = vmatpush.bf16.msra.mxu0 0
        %602 = vmatpush.bf16.msra.mxu0 0
        %603 = vmatpush.bf16.msra.mxu0 0
        %604 = vmatpush.bf16.msra.mxu0 %v595
        %605 = vmatpush.bf16.msra.mxu0 %v594
        %606 = vmatmul.bf16.gmra.mxu0 %v471
        %v607 = vpop.f32.mrf.mxu0
        %v608 = vadd.f32 %v414, %v607
        %v609 = vpop.f32.mrf.mxu0
        %610 = vdwg.mxu0
        %v615 = vunpack.c.l.b16 %v289
        %v616 = vunpack.c.l.b16 %v290
        %v617 = vunpack.c.l.b16 %v291
        %v618 = vunpack.c.l.b16 %v292
        %v619 = vpack.c.b16 %v616, %v615
        %v620 = vpack.c.b16 %v618, %v617
        %623 = vmatpush.bf16.msra.mxu0 0
        %624 = vmatpush.bf16.msra.mxu0 0
        %625 = vmatpush.bf16.msra.mxu0 0
        %626 = vmatpush.bf16.msra.mxu0 0
        %627 = vmatpush.bf16.msra.mxu0 0
        %628 = vmatpush.bf16.msra.mxu0 0
        %629 = vmatpush.bf16.msra.mxu0 %v620
        %630 = vmatpush.bf16.msra.mxu0 %v619
        %631 = vmatmul.bf16.gmra.mxu0 %v471
        %v632 = vpop.f32.mrf.mxu0
        %v633 = vadd.f32 %v415, %v632
        %v634 = vpop.f32.mrf.mxu0
        %635 = vdwg.mxu0
        %v640 = vunpack.c.l.b16 %v293
        %v641 = vunpack.c.l.b16 %v294
        %v642 = vunpack.c.l.b16 %v295
        %v643 = vunpack.c.l.b16 %v296
        %v644 = vpack.c.b16 %v641, %v640
        %v645 = vpack.c.b16 %v643, %v642
        %648 = vmatpush.bf16.msra.mxu0 0
        %649 = vmatpush.bf16.msra.mxu0 0
        %650 = vmatpush.bf16.msra.mxu0 0
        %651 = vmatpush.bf16.msra.mxu0 0
        %652 = vmatpush.bf16.msra.mxu0 0
        %653 = vmatpush.bf16.msra.mxu0 0
        %654 = vmatpush.bf16.msra.mxu0 %v645
        %655 = vmatpush.bf16.msra.mxu0 %v644
        %656 = vmatmul.bf16.gmra.mxu0 %v471
        %v657 = vpop.f32.mrf.mxu0
        %v658 = vadd.f32 %v416, %v657
        %v659 = vpop.f32.mrf.mxu0
        %660 = vdwg.mxu0
        %v665 = vunpack.c.l.b16 %v297
        %v666 = vunpack.c.l.b16 %v298
        %v667 = vunpack.c.l.b16 %v299
        %v668 = vunpack.c.l.b16 %v300
        %v669 = vpack.c.b16 %v666, %v665
        %v670 = vpack.c.b16 %v668, %v667
        %v674 = vsel %vm469, %v263, 0
        %676 = vmatpush.bf16.msra.mxu0 0
        %677 = vmatpush.bf16.msra.mxu0 0
        %678 = vmatpush.bf16.msra.mxu0 0
        %679 = vmatpush.bf16.msra.mxu0 0
        %680 = vmatpush.bf16.msra.mxu0 0
        %681 = vmatpush.bf16.msra.mxu0 0
        %682 = vmatpush.bf16.msra.mxu0 %v670
        %683 = vmatpush.bf16.msra.mxu0 %v669
        %684 = vmatmul.bf16.gmra.mxu0 %v674
        %v685 = vpop.f32.mrf.mxu0
        %v686 = vadd.f32 %v417, %v685
        %v687 = vpop.f32.mrf.mxu0
        %688 = vdwg.mxu0
        %v693 = vunpack.c.l.b16 %v301
        %v694 = vunpack.c.l.b16 %v302
        %v695 = vunpack.c.l.b16 %v303
        %v696 = vunpack.c.l.b16 %v304
        %v697 = vpack.c.b16 %v694, %v693
        %v698 = vpack.c.b16 %v696, %v695
        %701 = vmatpush.bf16.msra.mxu0 0
        %702 = vmatpush.bf16.msra.mxu0 0
        %703 = vmatpush.bf16.msra.mxu0 0
        %704 = vmatpush.bf16.msra.mxu0 0
        %705 = vmatpush.bf16.msra.mxu0 0
        %706 = vmatpush.bf16.msra.mxu0 0
        %707 = vmatpush.bf16.msra.mxu0 %v698
        %708 = vmatpush.bf16.msra.mxu0 %v697
        %709 = vmatmul.bf16.gmra.mxu0 %v674
        %v710 = vpop.f32.mrf.mxu0
        %v711 = vadd.f32 %v418, %v710
        %v712 = vpop.f32.mrf.mxu0
        %713 = vdwg.mxu0
        %v718 = vunpack.c.l.b16 %v305
        %v719 = vunpack.c.l.b16 %v306
        %v720 = vunpack.c.l.b16 %v307
        %v721 = vunpack.c.l.b16 %v308
        %v722 = vpack.c.b16 %v719, %v718
        %v723 = vpack.c.b16 %v721, %v720
        %726 = vmatpush.bf16.msra.mxu0 0
        %727 = vmatpush.bf16.msra.mxu0 0
        %728 = vmatpush.bf16.msra.mxu0 0
        %729 = vmatpush.bf16.msra.mxu0 0
        %730 = vmatpush.bf16.msra.mxu0 0
        %731 = vmatpush.bf16.msra.mxu0 0
        %732 = vmatpush.bf16.msra.mxu0 %v723
        %733 = vmatpush.bf16.msra.mxu0 %v722
        %734 = vmatmul.bf16.gmra.mxu0 %v674
        %v735 = vpop.f32.mrf.mxu0
        %v736 = vadd.f32 %v419, %v735
        %v737 = vpop.f32.mrf.mxu0
        %738 = vdwg.mxu0
        %v743 = vunpack.c.l.b16 %v309
        %v744 = vunpack.c.l.b16 %v310
        %v745 = vunpack.c.l.b16 %v311
        %v746 = vunpack.c.l.b16 %v312
        %v747 = vpack.c.b16 %v744, %v743
        %v748 = vpack.c.b16 %v746, %v745
        %751 = vmatpush.bf16.msra.mxu0 0
        %752 = vmatpush.bf16.msra.mxu0 0
        %753 = vmatpush.bf16.msra.mxu0 0
        %754 = vmatpush.bf16.msra.mxu0 0
        %755 = vmatpush.bf16.msra.mxu0 0
        %756 = vmatpush.bf16.msra.mxu0 0
        %757 = vmatpush.bf16.msra.mxu0 %v748
        %758 = vmatpush.bf16.msra.mxu0 %v747
        %759 = vmatmul.bf16.gmra.mxu0 %v674
        %v760 = vpop.f32.mrf.mxu0
        %v761 = vadd.f32 %v420, %v760
        %v762 = vpop.f32.mrf.mxu0
        %763 = vdwg.mxu0
        %v768 = vunpack.c.l.b16 %v313
        %v769 = vunpack.c.l.b16 %v314
        %v770 = vunpack.c.l.b16 %v315
        %v771 = vunpack.c.l.b16 %v316
        %v772 = vpack.c.b16 %v769, %v768
        %v773 = vpack.c.b16 %v771, %v770
        %776 = vmatpush.bf16.msra.mxu0 0
        %777 = vmatpush.bf16.msra.mxu0 0
        %778 = vmatpush.bf16.msra.mxu0 0
        %779 = vmatpush.bf16.msra.mxu0 0
        %780 = vmatpush.bf16.msra.mxu0 0
        %781 = vmatpush.bf16.msra.mxu0 0
        %782 = vmatpush.bf16.msra.mxu0 %v773
        %783 = vmatpush.bf16.msra.mxu0 %v772
        %784 = vmatmul.bf16.gmra.mxu0 %v674
        %v785 = vpop.f32.mrf.mxu0
        %v786 = vadd.f32 %v421, %v785
        %v787 = vpop.f32.mrf.mxu0
        %788 = vdwg.mxu0
        %v793 = vunpack.c.l.b16 %v317
        %v794 = vunpack.c.l.b16 %v318
        %v795 = vunpack.c.l.b16 %v319
        %v796 = vunpack.c.l.b16 %v320
        %v797 = vpack.c.b16 %v794, %v793
        %v798 = vpack.c.b16 %v796, %v795
        %801 = vmatpush.bf16.msra.mxu0 0
        %802 = vmatpush.bf16.msra.mxu0 0
        %803 = vmatpush.bf16.msra.mxu0 0
        %804 = vmatpush.bf16.msra.mxu0 0
        %805 = vmatpush.bf16.msra.mxu0 0
        %806 = vmatpush.bf16.msra.mxu0 0
        %807 = vmatpush.bf16.msra.mxu0 %v798
        %808 = vmatpush.bf16.msra.mxu0 %v797
        %809 = vmatmul.bf16.gmra.mxu0 %v674
        %v810 = vpop.f32.mrf.mxu0
        %v811 = vadd.f32 %v422, %v810
        %v812 = vpop.f32.mrf.mxu0
        %813 = vdwg.mxu0
        %v818 = vunpack.c.l.b16 %v321
        %v819 = vunpack.c.l.b16 %v322
        %v820 = vunpack.c.l.b16 %v323
        %v821 = vunpack.c.l.b16 %v324
        %v822 = vpack.c.b16 %v819, %v818
        %v823 = vpack.c.b16 %v821, %v820
        %826 = vmatpush.bf16.msra.mxu0 0
        %827 = vmatpush.bf16.msra.mxu0 0
        %828 = vmatpush.bf16.msra.mxu0 0
        %829 = vmatpush.bf16.msra.mxu0 0
        %830 = vmatpush.bf16.msra.mxu0 0
        %831 = vmatpush.bf16.msra.mxu0 0
        %832 = vmatpush.bf16.msra.mxu0 %v823
        %833 = vmatpush.bf16.msra.mxu0 %v822
        %834 = vmatmul.bf16.gmra.mxu0 %v674
        %v835 = vpop.f32.mrf.mxu0
        %v836 = vadd.f32 %v423, %v835
        %v837 = vpop.f32.mrf.mxu0
        %838 = vdwg.mxu0
        %v843 = vunpack.c.l.b16 %v325
        %v844 = vunpack.c.l.b16 %v326
        %v845 = vunpack.c.l.b16 %v327
        %v846 = vunpack.c.l.b16 %v328
        %v847 = vpack.c.b16 %v844, %v843
        %v848 = vpack.c.b16 %v846, %v845
        %851 = vmatpush.bf16.msra.mxu0 0
        %852 = vmatpush.bf16.msra.mxu0 0
        %853 = vmatpush.bf16.msra.mxu0 0
        %854 = vmatpush.bf16.msra.mxu0 0
        %855 = vmatpush.bf16.msra.mxu0 0
        %856 = vmatpush.bf16.msra.mxu0 0
        %857 = vmatpush.bf16.msra.mxu0 %v848
        %858 = vmatpush.bf16.msra.mxu0 %v847
        %859 = vmatmul.bf16.gmra.mxu0 %v674
        %v860 = vpop.f32.mrf.mxu0
        %v861 = vadd.f32 %v424, %v860
        %v862 = vpop.f32.mrf.mxu0
        %863 = vdwg.mxu0
        %v868 = vunpack.c.l.b16 %v329
        %v869 = vunpack.c.l.b16 %v330
        %v870 = vunpack.c.l.b16 %v331
        %v871 = vunpack.c.l.b16 %v332
        %v872 = vpack.c.b16 %v869, %v868
        %v873 = vpack.c.b16 %v871, %v870
        %v877 = vsel %vm469, %v264, 0
        %879 = vmatpush.bf16.msra.mxu0 0
        %880 = vmatpush.bf16.msra.mxu0 0
        %881 = vmatpush.bf16.msra.mxu0 0
        %882 = vmatpush.bf16.msra.mxu0 0
        %883 = vmatpush.bf16.msra.mxu0 0
        %884 = vmatpush.bf16.msra.mxu0 0
        %885 = vmatpush.bf16.msra.mxu0 %v873
        %886 = vmatpush.bf16.msra.mxu0 %v872
        %887 = vmatmul.bf16.gmra.mxu0 %v877
        %v888 = vpop.f32.mrf.mxu0
        %v889 = vadd.f32 %v425, %v888
        %v890 = vpop.f32.mrf.mxu0
        %891 = vdwg.mxu0
        %v896 = vunpack.c.l.b16 %v333
        %v897 = vunpack.c.l.b16 %v334
        %v898 = vunpack.c.l.b16 %v335
        %v899 = vunpack.c.l.b16 %v336
        %v900 = vpack.c.b16 %v897, %v896
        %v901 = vpack.c.b16 %v899, %v898
        %904 = vmatpush.bf16.msra.mxu0 0
        %905 = vmatpush.bf16.msra.mxu0 0
        %906 = vmatpush.bf16.msra.mxu0 0
        %907 = vmatpush.bf16.msra.mxu0 0
        %908 = vmatpush.bf16.msra.mxu0 0
        %909 = vmatpush.bf16.msra.mxu0 0
        %910 = vmatpush.bf16.msra.mxu0 %v901
        %911 = vmatpush.bf16.msra.mxu0 %v900
        %912 = vmatmul.bf16.gmra.mxu0 %v877
        %v913 = vpop.f32.mrf.mxu0
        %v914 = vadd.f32 %v426, %v913
        %v915 = vpop.f32.mrf.mxu0
        %916 = vdwg.mxu0
        %v921 = vunpack.c.l.b16 %v337
        %v922 = vunpack.c.l.b16 %v338
        %v923 = vunpack.c.l.b16 %v339
        %v924 = vunpack.c.l.b16 %v340
        %v925 = vpack.c.b16 %v922, %v921
        %v926 = vpack.c.b16 %v924, %v923
        %929 = vmatpush.bf16.msra.mxu0 0
        %930 = vmatpush.bf16.msra.mxu0 0
        %931 = vmatpush.bf16.msra.mxu0 0
        %932 = vmatpush.bf16.msra.mxu0 0
        %933 = vmatpush.bf16.msra.mxu0 0
        %934 = vmatpush.bf16.msra.mxu0 0
        %935 = vmatpush.bf16.msra.mxu0 %v926
        %936 = vmatpush.bf16.msra.mxu0 %v925
        %937 = vmatmul.bf16.gmra.mxu0 %v877
        %v938 = vpop.f32.mrf.mxu0
        %v939 = vadd.f32 %v427, %v938
        %v940 = vpop.f32.mrf.mxu0
        %941 = vdwg.mxu0
        %v946 = vunpack.c.l.b16 %v341
        %v947 = vunpack.c.l.b16 %v342
        %v948 = vunpack.c.l.b16 %v343
        %v949 = vunpack.c.l.b16 %v344
        %v950 = vpack.c.b16 %v947, %v946
        %v951 = vpack.c.b16 %v949, %v948
        %954 = vmatpush.bf16.msra.mxu0 0
        %955 = vmatpush.bf16.msra.mxu0 0
        %956 = vmatpush.bf16.msra.mxu0 0
        %957 = vmatpush.bf16.msra.mxu0 0
        %958 = vmatpush.bf16.msra.mxu0 0
        %959 = vmatpush.bf16.msra.mxu0 0
        %960 = vmatpush.bf16.msra.mxu0 %v951
        %961 = vmatpush.bf16.msra.mxu0 %v950
        %962 = vmatmul.bf16.gmra.mxu0 %v877
        %v963 = vpop.f32.mrf.mxu0
        %v964 = vadd.f32 %v428, %v963
        %v965 = vpop.f32.mrf.mxu0
        %966 = vdwg.mxu0
        %v971 = vunpack.c.l.b16 %v345
        %v972 = vunpack.c.l.b16 %v346
        %v973 = vunpack.c.l.b16 %v347
        %v974 = vunpack.c.l.b16 %v348
        %v975 = vpack.c.b16 %v972, %v971
        %v976 = vpack.c.b16 %v974, %v973
        %979 = vmatpush.bf16.msra.mxu0 0
        %980 = vmatpush.bf16.msra.mxu0 0
        %981 = vmatpush.bf16.msra.mxu0 0
        %982 = vmatpush.bf16.msra.mxu0 0
        %983 = vmatpush.bf16.msra.mxu0 0
        %984 = vmatpush.bf16.msra.mxu0 0
        %985 = vmatpush.bf16.msra.mxu0 %v976
        %986 = vmatpush.bf16.msra.mxu0 %v975
        %987 = vmatmul.bf16.gmra.mxu0 %v877
        %v988 = vpop.f32.mrf.mxu0
        %v989 = vadd.f32 %v429, %v988
        %v990 = vpop.f32.mrf.mxu0
        %991 = vdwg.mxu0
        %v996 = vunpack.c.l.b16 %v349
        %v997 = vunpack.c.l.b16 %v350
        %v998 = vunpack.c.l.b16 %v351
        %v999 = vunpack.c.l.b16 %v352
        %v1000 = vpack.c.b16 %v997, %v996
        %v1001 = vpack.c.b16 %v999, %v998
        %1004 = vmatpush.bf16.msra.mxu0 0
        %1005 = vmatpush.bf16.msra.mxu0 0
        %1006 = vmatpush.bf16.msra.mxu0 0
        %1007 = vmatpush.bf16.msra.mxu0 0
        %1008 = vmatpush.bf16.msra.mxu0 0
        %1009 = vmatpush.bf16.msra.mxu0 0
        %1010 = vmatpush.bf16.msra.mxu0 %v1001
        %1011 = vmatpush.bf16.msra.mxu0 %v1000
        %1012 = vmatmul.bf16.gmra.mxu0 %v877
        %v1013 = vpop.f32.mrf.mxu0
        %v1014 = vadd.f32 %v430, %v1013
        %v1015 = vpop.f32.mrf.mxu0
        %1016 = vdwg.mxu0
        %v1021 = vunpack.c.l.b16 %v353
        %v1022 = vunpack.c.l.b16 %v354
        %v1023 = vunpack.c.l.b16 %v355
        %v1024 = vunpack.c.l.b16 %v356
        %v1025 = vpack.c.b16 %v1022, %v1021
        %v1026 = vpack.c.b16 %v1024, %v1023
        %1029 = vmatpush.bf16.msra.mxu0 0
        %1030 = vmatpush.bf16.msra.mxu0 0
        %1031 = vmatpush.bf16.msra.mxu0 0
        %1032 = vmatpush.bf16.msra.mxu0 0
        %1033 = vmatpush.bf16.msra.mxu0 0
        %1034 = vmatpush.bf16.msra.mxu0 0
        %1035 = vmatpush.bf16.msra.mxu0 %v1026
        %1036 = vmatpush.bf16.msra.mxu0 %v1025
        %1037 = vmatmul.bf16.gmra.mxu0 %v877
        %v1038 = vpop.f32.mrf.mxu0
        %v1039 = vadd.f32 %v431, %v1038
        %v1040 = vpop.f32.mrf.mxu0
        %1041 = vdwg.mxu0
        %v1046 = vunpack.c.l.b16 %v357
        %v1047 = vunpack.c.l.b16 %v358
        %v1048 = vunpack.c.l.b16 %v359
        %v1049 = vunpack.c.l.b16 %v360
        %v1050 = vpack.c.b16 %v1047, %v1046
        %v1051 = vpack.c.b16 %v1049, %v1048
        %1054 = vmatpush.bf16.msra.mxu0 0
        %1055 = vmatpush.bf16.msra.mxu0 0
        %1056 = vmatpush.bf16.msra.mxu0 0
        %1057 = vmatpush.bf16.msra.mxu0 0
        %1058 = vmatpush.bf16.msra.mxu0 0
        %1059 = vmatpush.bf16.msra.mxu0 0
        %1060 = vmatpush.bf16.msra.mxu0 %v1051
        %1061 = vmatpush.bf16.msra.mxu0 %v1050
        %1062 = vmatmul.bf16.gmra.mxu0 %v877
        %v1063 = vpop.f32.mrf.mxu0
        %v1064 = vadd.f32 %v432, %v1063
        %v1065 = vpop.f32.mrf.mxu0
        %1066 = vdwg.mxu0
        %v1067 = vpack.c.bf16 %v483, %v483
        %v1068 = vpack.c.bf16 %v508, %v508
        %v1069 = vpack.c.bf16 %v533, %v533
        %v1070 = vpack.c.bf16 %v558, %v558
        %v1071 = vpack.c.bf16 %v583, %v583
        %v1072 = vpack.c.bf16 %v608, %v608
        %v1073 = vpack.c.bf16 %v633, %v633
        %v1074 = vpack.c.bf16 %v658, %v658
        %v1075 = vpack.c.bf16 %v686, %v686
        %v1076 = vpack.c.bf16 %v711, %v711
        %v1077 = vpack.c.bf16 %v736, %v736
        %v1078 = vpack.c.bf16 %v761, %v761
        %v1079 = vpack.c.bf16 %v786, %v786
        %v1080 = vpack.c.bf16 %v811, %v811
        %v1081 = vpack.c.bf16 %v836, %v836
        %v1082 = vpack.c.bf16 %v861, %v861
        %v1083 = vpack.c.bf16 %v889, %v889
        %v1084 = vpack.c.bf16 %v914, %v914
        %v1085 = vpack.c.bf16 %v939, %v939
        %v1086 = vpack.c.bf16 %v964, %v964
        %v1087 = vpack.c.bf16 %v989, %v989
        %v1088 = vpack.c.bf16 %v1014, %v1014
        %v1089 = vpack.c.bf16 %v1039, %v1039
        %v1090 = vpack.c.bf16 %v1064, %v1064
        %vm1091 = vcmask 31744
        %v1093 = vsel %vm1091, %v1067, 0
        %v1096 = vsel %vm1091, %v1075, 0
        %1098 = vmatpush.bf16.xpose.msra.mxu0 0
        %1099 = vmatpush.bf16.xpose.msra.mxu0 0
        %1100 = vmatpush.bf16.xpose.msra.mxu0 0
        %1101 = vmatpush.bf16.xpose.msra.mxu0 0
        %1102 = vmatpush.bf16.xpose.msra.mxu0 0
        %1103 = vmatpush.bf16.xpose.msra.mxu0 0
        %1104 = vmatpush.bf16.xpose.msra.mxu0 0
        %1105 = vmatpush.bf16.xpose.msra.mxu0 %v1096
        %1106 = vmatmul.bf16.gmra.mxu0 %v1093
        %v1107 = vpop.f32.mrf.mxu0
        %v1108 = vadd.f32 0.0, %v1107
        %v1109 = vpop.f32.mrf.mxu0
        %1110 = vdwg.mxu0
        %v1112 = vsel %vm1091, %v1068, 0
        %v1115 = vsel %vm1091, %v1076, 0
        %1117 = vmatpush.bf16.xpose.msra.mxu0 0
        %1118 = vmatpush.bf16.xpose.msra.mxu0 0
        %1119 = vmatpush.bf16.xpose.msra.mxu0 0
        %1120 = vmatpush.bf16.xpose.msra.mxu0 0
        %1121 = vmatpush.bf16.xpose.msra.mxu0 0
        %1122 = vmatpush.bf16.xpose.msra.mxu0 0
        %1123 = vmatpush.bf16.xpose.msra.mxu0 0
        %1124 = vmatpush.bf16.xpose.msra.mxu0 %v1115
        %1125 = vmatmul.bf16.gmra.mxu0 %v1112
        %v1126 = vpop.f32.mrf.mxu0
        %v1127 = vadd.f32 0.0, %v1126
        %v1128 = vpop.f32.mrf.mxu0
        %1129 = vdwg.mxu0
        %v1131 = vsel %vm1091, %v1069, 0
        %v1134 = vsel %vm1091, %v1077, 0
        %1136 = vmatpush.bf16.xpose.msra.mxu0 0
        %1137 = vmatpush.bf16.xpose.msra.mxu0 0
        %1138 = vmatpush.bf16.xpose.msra.mxu0 0
        %1139 = vmatpush.bf16.xpose.msra.mxu0 0
        %1140 = vmatpush.bf16.xpose.msra.mxu0 0
        %1141 = vmatpush.bf16.xpose.msra.mxu0 0
        %1142 = vmatpush.bf16.xpose.msra.mxu0 0
        %1143 = vmatpush.bf16.xpose.msra.mxu0 %v1134
        %1144 = vmatmul.bf16.gmra.mxu0 %v1131
        %v1145 = vpop.f32.mrf.mxu0
        %v1146 = vadd.f32 0.0, %v1145
        %v1147 = vpop.f32.mrf.mxu0
        %1148 = vdwg.mxu0
        %v1150 = vsel %vm1091, %v1070, 0
        %v1153 = vsel %vm1091, %v1078, 0
        %1155 = vmatpush.bf16.xpose.msra.mxu0 0
        %1156 = vmatpush.bf16.xpose.msra.mxu0 0
        %1157 = vmatpush.bf16.xpose.msra.mxu0 0
        %1158 = vmatpush.bf16.xpose.msra.mxu0 0
        %1159 = vmatpush.bf16.xpose.msra.mxu0 0
        %1160 = vmatpush.bf16.xpose.msra.mxu0 0
        %1161 = vmatpush.bf16.xpose.msra.mxu0 0
        %1162 = vmatpush.bf16.xpose.msra.mxu0 %v1153
        %1163 = vmatmul.bf16.gmra.mxu0 %v1150
        %v1164 = vpop.f32.mrf.mxu0
        %v1165 = vadd.f32 0.0, %v1164
        %v1166 = vpop.f32.mrf.mxu0
        %1167 = vdwg.mxu0
        %v1169 = vsel %vm1091, %v1071, 0
        %v1172 = vsel %vm1091, %v1079, 0
        %1174 = vmatpush.bf16.xpose.msra.mxu0 0
        %1175 = vmatpush.bf16.xpose.msra.mxu0 0
        %1176 = vmatpush.bf16.xpose.msra.mxu0 0
        %1177 = vmatpush.bf16.xpose.msra.mxu0 0
        %1178 = vmatpush.bf16.xpose.msra.mxu0 0
        %1179 = vmatpush.bf16.xpose.msra.mxu0 0
        %1180 = vmatpush.bf16.xpose.msra.mxu0 0
        %1181 = vmatpush.bf16.xpose.msra.mxu0 %v1172
        %1182 = vmatmul.bf16.gmra.mxu0 %v1169
        %v1183 = vpop.f32.mrf.mxu0
        %v1184 = vadd.f32 0.0, %v1183
        %v1185 = vpop.f32.mrf.mxu0
        %1186 = vdwg.mxu0
        %v1188 = vsel %vm1091, %v1072, 0
        %v1191 = vsel %vm1091, %v1080, 0
        %1193 = vmatpush.bf16.xpose.msra.mxu0 0
        %1194 = vmatpush.bf16.xpose.msra.mxu0 0
        %1195 = vmatpush.bf16.xpose.msra.mxu0 0
        %1196 = vmatpush.bf16.xpose.msra.mxu0 0
        %1197 = vmatpush.bf16.xpose.msra.mxu0 0
        %1198 = vmatpush.bf16.xpose.msra.mxu0 0
        %1199 = vmatpush.bf16.xpose.msra.mxu0 0
        %1200 = vmatpush.bf16.xpose.msra.mxu0 %v1191
        %1201 = vmatmul.bf16.gmra.mxu0 %v1188
        %v1202 = vpop.f32.mrf.mxu0
        %v1203 = vadd.f32 0.0, %v1202
        %v1204 = vpop.f32.mrf.mxu0
        %1205 = vdwg.mxu0
        %v1207 = vsel %vm1091, %v1073, 0
        %v1210 = vsel %vm1091, %v1081, 0
        %1212 = vmatpush.bf16.xpose.msra.mxu0 0
        %1213 = vmatpush.bf16.xpose.msra.mxu0 0
        %1214 = vmatpush.bf16.xpose.msra.mxu0 0
        %1215 = vmatpush.bf16.xpose.msra.mxu0 0
        %1216 = vmatpush.bf16.xpose.msra.mxu0 0
        %1217 = vmatpush.bf16.xpose.msra.mxu0 0
        %1218 = vmatpush.bf16.xpose.msra.mxu0 0
        %1219 = vmatpush.bf16.xpose.msra.mxu0 %v1210
        %1220 = vmatmul.bf16.gmra.mxu0 %v1207
        %v1221 = vpop.f32.mrf.mxu0
        %v1222 = vadd.f32 0.0, %v1221
        %v1223 = vpop.f32.mrf.mxu0
        %1224 = vdwg.mxu0
        %v1226 = vsel %vm1091, %v1074, 0
        %v1229 = vsel %vm1091, %v1082, 0
        %1231 = vmatpush.bf16.xpose.msra.mxu0 0
        %1232 = vmatpush.bf16.xpose.msra.mxu0 0
        %1233 = vmatpush.bf16.xpose.msra.mxu0 0
        %1234 = vmatpush.bf16.xpose.msra.mxu0 0
        %1235 = vmatpush.bf16.xpose.msra.mxu0 0
        %1236 = vmatpush.bf16.xpose.msra.mxu0 0
        %1237 = vmatpush.bf16.xpose.msra.mxu0 0
        %1238 = vmatpush.bf16.xpose.msra.mxu0 %v1229
        %1239 = vmatmul.bf16.gmra.mxu0 %v1226
        %v1240 = vpop.f32.mrf.mxu0
        %v1241 = vadd.f32 0.0, %v1240
        %v1242 = vpop.f32.mrf.mxu0
        %1243 = vdwg.mxu0
        %vm1244 = vcmask 64512
        %v1245 = vsel %vm1244, %v1108, -inf
        %1246 = vmax.xlane.f32.xlu0 %v1245
        %v1247 = vpop.xlane.xlu0 %1246
        %v1248 = vsel %vm1244, %v1127, -inf
        %1249 = vmax.xlane.f32.xlu0 %v1248
        %v1250 = vpop.xlane.xlu0 %1249
        %v1251 = vsel %vm1244, %v1146, -inf
        %1252 = vmax.xlane.f32.xlu0 %v1251
        %v1253 = vpop.xlane.xlu0 %1252
        %v1254 = vsel %vm1244, %v1165, -inf
        %1255 = vmax.xlane.f32.xlu0 %v1254
        %v1256 = vpop.xlane.xlu0 %1255
        %v1257 = vsel %vm1244, %v1184, -inf
        %1258 = vmax.xlane.f32.xlu0 %v1257
        %v1259 = vpop.xlane.xlu0 %1258
        %v1260 = vsel %vm1244, %v1203, -inf
        %1261 = vmax.xlane.f32.xlu0 %v1260
        %v1262 = vpop.xlane.xlu0 %1261
        %v1263 = vsel %vm1244, %v1222, -inf
        %1264 = vmax.xlane.f32.xlu0 %v1263
        %v1265 = vpop.xlane.xlu0 %1264
        %v1266 = vsel %vm1244, %v1241, -inf
        %1267 = vmax.xlane.f32.xlu0 %v1266
        %v1268 = vpop.xlane.xlu0 %1267
        %v1269 = vsub.f32 %v1108, %v1247
        %v1270 = vsub.f32 %v1127, %v1250
        %v1271 = vsub.f32 %v1146, %v1253
        %v1272 = vsub.f32 %v1165, %v1256
        %v1273 = vsub.f32 %v1184, %v1259
        %v1274 = vsub.f32 %v1203, %v1262
        %v1275 = vsub.f32 %v1222, %v1265
        %v1276 = vsub.f32 %v1241, %v1268
        %v1277 = vmul.f32 %v1269, 1.442695
        %v1278 = vpow.pop %v1277
        %v1279 = vmul.f32 %v1270, 1.442695
        %v1280 = vpow.pop %v1279
        %v1281 = vmul.f32 %v1271, 1.442695
        %v1282 = vpow.pop %v1281
        %v1283 = vmul.f32 %v1272, 1.442695
        %v1284 = vpow.pop %v1283
        %v1285 = vmul.f32 %v1273, 1.442695
        %v1286 = vpow.pop %v1285
        %v1287 = vmul.f32 %v1274, 1.442695
        %v1288 = vpow.pop %v1287
        %v1289 = vmul.f32 %v1275, 1.442695
        %v1290 = vpow.pop %v1289
        %v1291 = vmul.f32 %v1276, 1.442695
        %v1292 = vpow.pop %v1291
        %v1293 = vsel %vm1244, %v1278, 0.0
        %1294 = vadd.xlane.f32.xlu0 %v1293
        %v1295 = vpop.xlane.xlu0 %1294
        %v1296 = vsel %vm1244, %v1280, 0.0
        %1297 = vadd.xlane.f32.xlu0 %v1296
        %v1298 = vpop.xlane.xlu0 %1297
        %v1299 = vsel %vm1244, %v1282, 0.0
        %1300 = vadd.xlane.f32.xlu0 %v1299
        %v1301 = vpop.xlane.xlu0 %1300
        %v1302 = vsel %vm1244, %v1284, 0.0
        %1303 = vadd.xlane.f32.xlu0 %v1302
        %v1304 = vpop.xlane.xlu0 %1303
        %v1305 = vsel %vm1244, %v1286, 0.0
        %1306 = vadd.xlane.f32.xlu0 %v1305
        %v1307 = vpop.xlane.xlu0 %1306
        %v1308 = vsel %vm1244, %v1288, 0.0
        %1309 = vadd.xlane.f32.xlu0 %v1308
        %v1310 = vpop.xlane.xlu0 %1309
        %v1311 = vsel %vm1244, %v1290, 0.0
        %1312 = vadd.xlane.f32.xlu0 %v1311
        %v1313 = vpop.xlane.xlu0 %1312
        %v1314 = vsel %vm1244, %v1292, 0.0
        %1315 = vadd.xlane.f32.xlu0 %v1314
        %v1316 = vpop.xlane.xlu0 %1315
        %v1317 = vrcp.pop %v1295
        %v1318 = vmul.f32 %v1295, %v1317
        %v1319 = vsub.f32 1.0, %v1318
        %v1320 = vmul.f32 %v1317, %v1319
        %v1321 = vadd.f32 %v1317, %v1320
        %vm1322 = vweird.f32 %v1295
        %vm1323 = vweird.f32 %v1317
        %vm1324 = vmor %vm1322, %vm1323
        %v1325 = vsel %vm1324, %v1317, %v1321
        %v1326 = vand.u32 2147483647, %v1295
        %vm1327 = vcmp.eq.f32.partialorder %v1326, 8.507059e+37
        %v1328 = vand.u32 %v1295, 2147483648
        %v1329 = vor.u32 1.1754944e-38, %v1328
        %v1330 = vsel %vm1327, %v1329, %v1325
        %v1331 = vmul.f32 %v1278, %v1330
        %v1332 = vrcp.pop %v1298
        %v1333 = vmul.f32 %v1298, %v1332
        %v1334 = vsub.f32 1.0, %v1333
        %v1335 = vmul.f32 %v1332, %v1334
        %v1336 = vadd.f32 %v1332, %v1335
        %vm1337 = vweird.f32 %v1298
        %vm1338 = vweird.f32 %v1332
        %vm1339 = vmor %vm1337, %vm1338
        %v1340 = vsel %vm1339, %v1332, %v1336
        %v1341 = vand.u32 2147483647, %v1298
        %vm1342 = vcmp.eq.f32.partialorder %v1341, 8.507059e+37
        %v1343 = vand.u32 %v1298, 2147483648
        %v1344 = vor.u32 1.1754944e-38, %v1343
        %v1345 = vsel %vm1342, %v1344, %v1340
        %v1346 = vmul.f32 %v1280, %v1345
        %v1347 = vrcp.pop %v1301
        %v1348 = vmul.f32 %v1301, %v1347
        %v1349 = vsub.f32 1.0, %v1348
        %v1350 = vmul.f32 %v1347, %v1349
        %v1351 = vadd.f32 %v1347, %v1350
        %vm1352 = vweird.f32 %v1301
        %vm1353 = vweird.f32 %v1347
        %vm1354 = vmor %vm1352, %vm1353
        %v1355 = vsel %vm1354, %v1347, %v1351
        %v1356 = vand.u32 2147483647, %v1301
        %vm1357 = vcmp.eq.f32.partialorder %v1356, 8.507059e+37
        %v1358 = vand.u32 %v1301, 2147483648
        %v1359 = vor.u32 1.1754944e-38, %v1358
        %v1360 = vsel %vm1357, %v1359, %v1355
        %v1361 = vmul.f32 %v1282, %v1360
        %v1362 = vrcp.pop %v1304
        %v1363 = vmul.f32 %v1304, %v1362
        %v1364 = vsub.f32 1.0, %v1363
        %v1365 = vmul.f32 %v1362, %v1364
        %v1366 = vadd.f32 %v1362, %v1365
        %vm1367 = vweird.f32 %v1304
        %vm1368 = vweird.f32 %v1362
        %vm1369 = vmor %vm1367, %vm1368
        %v1370 = vsel %vm1369, %v1362, %v1366
        %v1371 = vand.u32 2147483647, %v1304
        %vm1372 = vcmp.eq.f32.partialorder %v1371, 8.507059e+37
        %v1373 = vand.u32 %v1304, 2147483648
        %v1374 = vor.u32 1.1754944e-38, %v1373
        %v1375 = vsel %vm1372, %v1374, %v1370
        %v1376 = vmul.f32 %v1284, %v1375
        %v1377 = vrcp.pop %v1307
        %v1378 = vmul.f32 %v1307, %v1377
        %v1379 = vsub.f32 1.0, %v1378
        %v1380 = vmul.f32 %v1377, %v1379
        %v1381 = vadd.f32 %v1377, %v1380
        %vm1382 = vweird.f32 %v1307
        %vm1383 = vweird.f32 %v1377
        %vm1384 = vmor %vm1382, %vm1383
        %v1385 = vsel %vm1384, %v1377, %v1381
        %v1386 = vand.u32 2147483647, %v1307
        %vm1387 = vcmp.eq.f32.partialorder %v1386, 8.507059e+37
        %v1388 = vand.u32 %v1307, 2147483648
        %v1389 = vor.u32 1.1754944e-38, %v1388
        %v1390 = vsel %vm1387, %v1389, %v1385
        %v1391 = vmul.f32 %v1286, %v1390
        %v1392 = vrcp.pop %v1310
        %v1393 = vmul.f32 %v1310, %v1392
        %v1394 = vsub.f32 1.0, %v1393
        %v1395 = vmul.f32 %v1392, %v1394
        %v1396 = vadd.f32 %v1392, %v1395
        %vm1397 = vweird.f32 %v1310
        %vm1398 = vweird.f32 %v1392
        %vm1399 = vmor %vm1397, %vm1398
        %v1400 = vsel %vm1399, %v1392, %v1396
        %v1401 = vand.u32 2147483647, %v1310
        %vm1402 = vcmp.eq.f32.partialorder %v1401, 8.507059e+37
        %v1403 = vand.u32 %v1310, 2147483648
        %v1404 = vor.u32 1.1754944e-38, %v1403
        %v1405 = vsel %vm1402, %v1404, %v1400
        %v1406 = vmul.f32 %v1288, %v1405
        %v1407 = vrcp.pop %v1313
        %v1408 = vmul.f32 %v1313, %v1407
        %v1409 = vsub.f32 1.0, %v1408
        %v1410 = vmul.f32 %v1407, %v1409
        %v1411 = vadd.f32 %v1407, %v1410
        %vm1412 = vweird.f32 %v1313
        %vm1413 = vweird.f32 %v1407
        %vm1414 = vmor %vm1412, %vm1413
        %v1415 = vsel %vm1414, %v1407, %v1411
        %v1416 = vand.u32 2147483647, %v1313
        %vm1417 = vcmp.eq.f32.partialorder %v1416, 8.507059e+37
        %v1418 = vand.u32 %v1313, 2147483648
        %v1419 = vor.u32 1.1754944e-38, %v1418
        %v1420 = vsel %vm1417, %v1419, %v1415
        %v1421 = vmul.f32 %v1290, %v1420
        %v1422 = vrcp.pop %v1316
        %v1423 = vmul.f32 %v1316, %v1422
        %v1424 = vsub.f32 1.0, %v1423
        %v1425 = vmul.f32 %v1422, %v1424
        %v1426 = vadd.f32 %v1422, %v1425
        %vm1427 = vweird.f32 %v1316
        %vm1428 = vweird.f32 %v1422
        %vm1429 = vmor %vm1427, %vm1428
        %v1430 = vsel %vm1429, %v1422, %v1426
        %v1431 = vand.u32 2147483647, %v1316
        %vm1432 = vcmp.eq.f32.partialorder %v1431, 8.507059e+37
        %v1433 = vand.u32 %v1316, 2147483648
        %v1434 = vor.u32 1.1754944e-38, %v1433
        %v1435 = vsel %vm1432, %v1434, %v1430
        %v1436 = vmul.f32 %v1292, %v1435
        %1437 = vst.msk [vmem:[%s255] sm:$0xff] %vm1244, %v1331
        %1438 = vst.msk [vmem:[%s255 + $0x8] sm:$0xff] %vm1244, %v1346
        %1439 = vst.msk [vmem:[%s255 + $0x10] sm:$0xff] %vm1244, %v1361
        %1440 = vst.msk [vmem:[%s255 + $0x18] sm:$0xff] %vm1244, %v1376
        %1441 = vst.msk [vmem:[%s255 + $0x20] sm:$0xff] %vm1244, %v1391
        %1442 = vst.msk [vmem:[%s255 + $0x28] sm:$0xff] %vm1244, %v1406
        %1443 = vst.msk [vmem:[%s255 + $0x30] sm:$0xff] %vm1244, %v1421
        %1444 = vst.msk [vmem:[%s255 + $0x38] sm:$0xff] %vm1244, %v1436
        %v1445 = vpack.c.bf16 %v1331, %v1331
        %v1446 = vpack.c.bf16 %v1346, %v1346
        %v1447 = vpack.c.bf16 %v1361, %v1361
        %v1448 = vpack.c.bf16 %v1376, %v1376
        %v1449 = vpack.c.bf16 %v1391, %v1391
        %v1450 = vpack.c.bf16 %v1406, %v1406
        %v1451 = vpack.c.bf16 %v1421, %v1421
        %v1452 = vpack.c.bf16 %v1436, %v1436
        %v1454 = vsel %vm1244, %v1445, 0
        %vm1456 = vcmask 1043456
        %v1458 = vsel %vm1456, %v1083, 0
        %1460 = vmatpush.bf16.msra.mxu0 0
        %1461 = vmatpush.bf16.msra.mxu0 0
        %1462 = vmatpush.bf16.msra.mxu0 0
        %1463 = vmatpush.bf16.msra.mxu0 0
        %1464 = vmatpush.bf16.msra.mxu0 0
        %1465 = vmatpush.bf16.msra.mxu0 0
        %1466 = vmatpush.bf16.msra.mxu0 0
        %1467 = vmatpush.bf16.msra.mxu0 %v1458
        %1468 = vmatmul.bf16.gmra.mxu0 %v1454
        %v1469 = vpop.f32.mrf.mxu0
        %v1470 = vadd.f32 0.0, %v1469
        %v1471 = vpop.f32.mrf.mxu0
        %1472 = vdwg.mxu0
        %v1474 = vsel %vm1244, %v1446, 0
        %v1477 = vsel %vm1456, %v1084, 0
        %1479 = vmatpush.bf16.msra.mxu0 0
        %1480 = vmatpush.bf16.msra.mxu0 0
        %1481 = vmatpush.bf16.msra.mxu0 0
        %1482 = vmatpush.bf16.msra.mxu0 0
        %1483 = vmatpush.bf16.msra.mxu0 0
        %1484 = vmatpush.bf16.msra.mxu0 0
        %1485 = vmatpush.bf16.msra.mxu0 0
        %1486 = vmatpush.bf16.msra.mxu0 %v1477
        %1487 = vmatmul.bf16.gmra.mxu0 %v1474
        %v1488 = vpop.f32.mrf.mxu0
        %v1489 = vadd.f32 0.0, %v1488
        %v1490 = vpop.f32.mrf.mxu0
        %1491 = vdwg.mxu0
        %v1493 = vsel %vm1244, %v1447, 0
        %v1496 = vsel %vm1456, %v1085, 0
        %1498 = vmatpush.bf16.msra.mxu0 0
        %1499 = vmatpush.bf16.msra.mxu0 0
        %1500 = vmatpush.bf16.msra.mxu0 0
        %1501 = vmatpush.bf16.msra.mxu0 0
        %1502 = vmatpush.bf16.msra.mxu0 0
        %1503 = vmatpush.bf16.msra.mxu0 0
        %1504 = vmatpush.bf16.msra.mxu0 0
        %1505 = vmatpush.bf16.msra.mxu0 %v1496
        %1506 = vmatmul.bf16.gmra.mxu0 %v1493
        %v1507 = vpop.f32.mrf.mxu0
        %v1508 = vadd.f32 0.0, %v1507
        %v1509 = vpop.f32.mrf.mxu0
        %1510 = vdwg.mxu0
        %v1512 = vsel %vm1244, %v1448, 0
        %v1515 = vsel %vm1456, %v1086, 0
        %1517 = vmatpush.bf16.msra.mxu0 0
        %1518 = vmatpush.bf16.msra.mxu0 0
        %1519 = vmatpush.bf16.msra.mxu0 0
        %1520 = vmatpush.bf16.msra.mxu0 0
        %1521 = vmatpush.bf16.msra.mxu0 0
        %1522 = vmatpush.bf16.msra.mxu0 0
        %1523 = vmatpush.bf16.msra.mxu0 0
        %1524 = vmatpush.bf16.msra.mxu0 %v1515
        %1525 = vmatmul.bf16.gmra.mxu0 %v1512
        %v1526 = vpop.f32.mrf.mxu0
        %v1527 = vadd.f32 0.0, %v1526
        %v1528 = vpop.f32.mrf.mxu0
        %1529 = vdwg.mxu0
        %v1531 = vsel %vm1244, %v1449, 0
        %v1534 = vsel %vm1456, %v1087, 0
        %1536 = vmatpush.bf16.msra.mxu0 0
        %1537 = vmatpush.bf16.msra.mxu0 0
        %1538 = vmatpush.bf16.msra.mxu0 0
        %1539 = vmatpush.bf16.msra.mxu0 0
        %1540 = vmatpush.bf16.msra.mxu0 0
        %1541 = vmatpush.bf16.msra.mxu0 0
        %1542 = vmatpush.bf16.msra.mxu0 0
        %1543 = vmatpush.bf16.msra.mxu0 %v1534
        %1544 = vmatmul.bf16.gmra.mxu0 %v1531
        %v1545 = vpop.f32.mrf.mxu0
        %v1546 = vadd.f32 0.0, %v1545
        %v1547 = vpop.f32.mrf.mxu0
        %1548 = vdwg.mxu0
        %v1550 = vsel %vm1244, %v1450, 0
        %v1553 = vsel %vm1456, %v1088, 0
        %1555 = vmatpush.bf16.msra.mxu0 0
        %1556 = vmatpush.bf16.msra.mxu0 0
        %1557 = vmatpush.bf16.msra.mxu0 0
        %1558 = vmatpush.bf16.msra.mxu0 0
        %1559 = vmatpush.bf16.msra.mxu0 0
        %1560 = vmatpush.bf16.msra.mxu0 0
        %1561 = vmatpush.bf16.msra.mxu0 0
        %1562 = vmatpush.bf16.msra.mxu0 %v1553
        %1563 = vmatmul.bf16.gmra.mxu0 %v1550
        %v1564 = vpop.f32.mrf.mxu0
        %v1565 = vadd.f32 0.0, %v1564
        %v1566 = vpop.f32.mrf.mxu0
        %1567 = vdwg.mxu0
        %v1569 = vsel %vm1244, %v1451, 0
        %v1572 = vsel %vm1456, %v1089, 0
        %1574 = vmatpush.bf16.msra.mxu0 0
        %1575 = vmatpush.bf16.msra.mxu0 0
        %1576 = vmatpush.bf16.msra.mxu0 0
        %1577 = vmatpush.bf16.msra.mxu0 0
        %1578 = vmatpush.bf16.msra.mxu0 0
        %1579 = vmatpush.bf16.msra.mxu0 0
        %1580 = vmatpush.bf16.msra.mxu0 0
        %1581 = vmatpush.bf16.msra.mxu0 %v1572
        %1582 = vmatmul.bf16.gmra.mxu0 %v1569
        %v1583 = vpop.f32.mrf.mxu0
        %v1584 = vadd.f32 0.0, %v1583
        %v1585 = vpop.f32.mrf.mxu0
        %1586 = vdwg.mxu0
        %v1588 = vsel %vm1244, %v1452, 0
        %v1591 = vsel %vm1456, %v1090, 0
        %1593 = vmatpush.bf16.msra.mxu0 0
        %1594 = vmatpush.bf16.msra.mxu0 0
        %1595 = vmatpush.bf16.msra.mxu0 0
        %1596 = vmatpush.bf16.msra.mxu0 0
        %1597 = vmatpush.bf16.msra.mxu0 0
        %1598 = vmatpush.bf16.msra.mxu0 0
        %1599 = vmatpush.bf16.msra.mxu0 0
        %1600 = vmatpush.bf16.msra.mxu0 %v1591
        %1601 = vmatmul.bf16.gmra.mxu0 %v1588
        %v1602 = vpop.f32.mrf.mxu0
        %v1603 = vadd.f32 0.0, %v1602
        %v1604 = vpop.f32.mrf.mxu0
        %1605 = vdwg.mxu0
        %v1606 = vpack.c.bf16 %v1470, %v1470
        %v1607 = vpack.c.bf16 %v1489, %v1489
        %v1608 = vpack.c.bf16 %v1508, %v1508
        %v1609 = vpack.c.bf16 %v1527, %v1527
        %v1610 = vpack.c.bf16 %v1546, %v1546
        %v1611 = vpack.c.bf16 %v1565, %v1565
        %v1612 = vpack.c.bf16 %v1584, %v1584
        %v1613 = vpack.c.bf16 %v1603, %v1603
        %v1614 = vld [vmem:[%s3] sm:$0x3]
        %v1615 = vld [vmem:[%s3 + $0x2] sm:$0x3]
        %v1616 = vld [vmem:[%s3 + $0x4] sm:$0x3]
        %v1617 = vld [vmem:[%s3 + $0x6] sm:$0x3]
        %v1618 = vld [vmem:[%s3 + $0x8] sm:$0x3]
        %v1619 = vld [vmem:[%s3 + $0xa] sm:$0x3]
        %v1620 = vld [vmem:[%s3 + $0xc] sm:$0x3]
        %v1621 = vld [vmem:[%s3 + $0xe] sm:$0x3]
        %v1623 = vsel %vm1091, %v1606, 0
        %vm1625 = vcmask 1041408
        %v1627 = vsel %vm1625, %v1614, 0
        %1629 = vmatpush.bf16.msra.mxu0 0
        %1630 = vmatpush.bf16.msra.mxu0 0
        %1631 = vmatpush.bf16.msra.mxu0 0
        %1632 = vmatpush.bf16.msra.mxu0 0
        %1633 = vmatpush.bf16.msra.mxu0 0
        %1634 = vmatpush.bf16.msra.mxu0 0
        %1635 = vmatpush.bf16.msra.mxu0 0
        %1636 = vmatpush.bf16.msra.mxu0 %v1627
        %1637 = vmatmul.bf16.gmra.mxu0 %v1623
        %v1638 = vpop.f32.mrf.mxu0
        %v1639 = vadd.f32 0.0, %v1638
        %v1640 = vpop.f32.mrf.mxu0
        %1641 = vdwg.mxu0
        %v1643 = vsel %vm1091, %v1607, 0
        %v1646 = vsel %vm1625, %v1615, 0
        %1648 = vmatpush.bf16.msra.mxu0 0
        %1649 = vmatpush.bf16.msra.mxu0 0
        %1650 = vmatpush.bf16.msra.mxu0 0
        %1651 = vmatpush.bf16.msra.mxu0 0
        %1652 = vmatpush.bf16.msra.mxu0 0
        %1653 = vmatpush.bf16.msra.mxu0 0
        %1654 = vmatpush.bf16.msra.mxu0 0
        %1655 = vmatpush.bf16.msra.mxu0 %v1646
        %1656 = vmatmul.bf16.gmra.mxu0 %v1643
        %v1657 = vpop.f32.mrf.mxu0
        %v1658 = vadd.f32 0.0, %v1657
        %v1659 = vpop.f32.mrf.mxu0
        %1660 = vdwg.mxu0
        %v1662 = vsel %vm1091, %v1608, 0
        %v1665 = vsel %vm1625, %v1616, 0
        %1667 = vmatpush.bf16.msra.mxu0 0
        %1668 = vmatpush.bf16.msra.mxu0 0
        %1669 = vmatpush.bf16.msra.mxu0 0
        %1670 = vmatpush.bf16.msra.mxu0 0
        %1671 = vmatpush.bf16.msra.mxu0 0
        %1672 = vmatpush.bf16.msra.mxu0 0
        %1673 = vmatpush.bf16.msra.mxu0 0
        %1674 = vmatpush.bf16.msra.mxu0 %v1665
        %1675 = vmatmul.bf16.gmra.mxu0 %v1662
        %v1676 = vpop.f32.mrf.mxu0
        %v1677 = vadd.f32 0.0, %v1676
        %v1678 = vpop.f32.mrf.mxu0
        %1679 = vdwg.mxu0
        %v1681 = vsel %vm1091, %v1609, 0
        %v1684 = vsel %vm1625, %v1617, 0
        %1686 = vmatpush.bf16.msra.mxu0 0
        %1687 = vmatpush.bf16.msra.mxu0 0
        %1688 = vmatpush.bf16.msra.mxu0 0
        %1689 = vmatpush.bf16.msra.mxu0 0
        %1690 = vmatpush.bf16.msra.mxu0 0
        %1691 = vmatpush.bf16.msra.mxu0 0
        %1692 = vmatpush.bf16.msra.mxu0 0
        %1693 = vmatpush.bf16.msra.mxu0 %v1684
        %1694 = vmatmul.bf16.gmra.mxu0 %v1681
        %v1695 = vpop.f32.mrf.mxu0
        %v1696 = vadd.f32 0.0, %v1695
        %v1697 = vpop.f32.mrf.mxu0
        %1698 = vdwg.mxu0
        %v1700 = vsel %vm1091, %v1610, 0
        %v1703 = vsel %vm1625, %v1618, 0
        %1705 = vmatpush.bf16.msra.mxu0 0
        %1706 = vmatpush.bf16.msra.mxu0 0
        %1707 = vmatpush.bf16.msra.mxu0 0
        %1708 = vmatpush.bf16.msra.mxu0 0
        %1709 = vmatpush.bf16.msra.mxu0 0
        %1710 = vmatpush.bf16.msra.mxu0 0
        %1711 = vmatpush.bf16.msra.mxu0 0
        %1712 = vmatpush.bf16.msra.mxu0 %v1703
        %1713 = vmatmul.bf16.gmra.mxu0 %v1700
        %v1714 = vpop.f32.mrf.mxu0
        %v1715 = vadd.f32 0.0, %v1714
        %v1716 = vpop.f32.mrf.mxu0
        %1717 = vdwg.mxu0
        %v1719 = vsel %vm1091, %v1611, 0
        %v1722 = vsel %vm1625, %v1619, 0
        %1724 = vmatpush.bf16.msra.mxu0 0
        %1725 = vmatpush.bf16.msra.mxu0 0
        %1726 = vmatpush.bf16.msra.mxu0 0
        %1727 = vmatpush.bf16.msra.mxu0 0
        %1728 = vmatpush.bf16.msra.mxu0 0
        %1729 = vmatpush.bf16.msra.mxu0 0
        %1730 = vmatpush.bf16.msra.mxu0 0
        %1731 = vmatpush.bf16.msra.mxu0 %v1722
        %1732 = vmatmul.bf16.gmra.mxu0 %v1719
        %v1733 = vpop.f32.mrf.mxu0
        %v1734 = vadd.f32 0.0, %v1733
        %v1735 = vpop.f32.mrf.mxu0
        %1736 = vdwg.mxu0
        %v1738 = vsel %vm1091, %v1612, 0
        %v1741 = vsel %vm1625, %v1620, 0
        %1743 = vmatpush.bf16.msra.mxu0 0
        %1744 = vmatpush.bf16.msra.mxu0 0
        %1745 = vmatpush.bf16.msra.mxu0 0
        %1746 = vmatpush.bf16.msra.mxu0 0
        %1747 = vmatpush.bf16.msra.mxu0 0
        %1748 = vmatpush.bf16.msra.mxu0 0
        %1749 = vmatpush.bf16.msra.mxu0 0
        %1750 = vmatpush.bf16.msra.mxu0 %v1741
        %1751 = vmatmul.bf16.gmra.mxu0 %v1738
        %v1752 = vpop.f32.mrf.mxu0
        %v1753 = vadd.f32 0.0, %v1752
        %v1754 = vpop.f32.mrf.mxu0
        %1755 = vdwg.mxu0
        %v1757 = vsel %vm1091, %v1613, 0
        %v1760 = vsel %vm1625, %v1621, 0
        %1762 = vmatpush.bf16.msra.mxu0 0
        %1763 = vmatpush.bf16.msra.mxu0 0
        %1764 = vmatpush.bf16.msra.mxu0 0
        %1765 = vmatpush.bf16.msra.mxu0 0
        %1766 = vmatpush.bf16.msra.mxu0 0
        %1767 = vmatpush.bf16.msra.mxu0 0
        %1768 = vmatpush.bf16.msra.mxu0 0
        %1769 = vmatpush.bf16.msra.mxu0 %v1760
        %1770 = vmatmul.bf16.gmra.mxu0 %v1757
        %v1771 = vpop.f32.mrf.mxu0
        %v1772 = vadd.f32 0.0, %v1771
        %v1773 = vpop.f32.mrf.mxu0
        %1774 = vdwg.mxu0
        %v1775 = vsel %vm469, %v1639, 0.0
        %v1776 = vsel %vm469, %v1658, 0.0
        %v1777 = vadd.f32 %v1775, %v1776
        %v1778 = vsel %vm469, %v1677, 0.0
        %v1779 = vadd.f32 %v1777, %v1778
        %v1780 = vsel %vm469, %v1696, 0.0
        %v1781 = vadd.f32 %v1779, %v1780
        %v1782 = vsel %vm469, %v1715, 0.0
        %v1783 = vadd.f32 %v1781, %v1782
        %v1784 = vsel %vm469, %v1734, 0.0
        %v1785 = vadd.f32 %v1783, %v1784
        %v1786 = vsel %vm469, %v1753, 0.0
        %v1787 = vadd.f32 %v1785, %v1786
        %v1788 = vsel %vm469, %v1772, 0.0
        %v1789 = vadd.f32 %v1787, %v1788
        %v1790 = vld [vmem:[%s4] sm:$0x1]
        %v1792 = vperm.slane %v1790, 0
        %v1794 = vadd.f32 %v1789, %v1792
        %1795 = vst.msk [vmem:[%s248] sm:$0xff] %vm469, %v1794
        %s1796 = sand.u32 %s142, 1
        %s1797 = scalar_lea.sflag [#allocation3], %s1796
        %s1798 = sand.u32 %s142, 1
        %s1799 = smul.addr %s1798, 8
        %s1800 = scalar_lea.vmem [#allocation2], %s1799
        %s1801 = sand.u32 %s168, 1
        %s1802 = scalar_lea.sflag [#allocation5], %s1801
        %s1803 = sand.u32 %s168, 1
        %s1804 = smul.addr %s1803, 64
        %s1805 = scalar_lea.vmem [#allocation4], %s1804
        // Predicated region
        $region41: #{multi_head_attention.1} parent=39 // pred_check
          %p1806 = pneg %p152
        $region42: #{multi_head_attention.1} parent=39 // pred_check_branch
          %1808 = sbr.rel (%p1806) target = $region44
        $region43: #{multi_head_attention.1} parent=39 // pred_region
          %1810 = vsyncadd %s1797, 0
          %s1811 = smul.addr %s24, 8
          %s1812 = scalar_lea.hbm %s5, %s1811
          %s1814 = sshll.u32 %s1800, 4
          %s1815 = int_to_ptr.vmem [resolvable:$true] %s1814
          %s1816 = sshll.u32 %s1812, 4
          %s1817 = int_to_ptr.hbm [resolvable:$true] %s1816
          %1819 = dma.vmem_to_hbm [thread:$0]  %s1815, 128, %s1817, %s1797
        $region44: #{multi_head_attention.1} parent=39 // pred_fallthru
          _
        // Predicated region
        $region45: #{multi_head_attention.1} parent=39 // pred_check
          %p1820 = pneg %p178
        $region46: #{multi_head_attention.1} parent=39 // pred_check_branch
          %1822 = sbr.rel (%p1820) target = $region48
        $region47: #{multi_head_attention.1} parent=39 // pred_region
          %1824 = vsyncadd %s1802, 0
          %s1825 = smul.addr %s24, 8
          %s1826 = smul.addr %s1825, 8
          %s1827 = scalar_lea.hbm %s6, %s1826
          %s1828 = sshll.u32 %s1805, 4
          %s1829 = int_to_ptr.vmem [resolvable:$true] %s1828
          %s1830 = sshll.u32 %s1827, 4
          %s1831 = int_to_ptr.hbm [resolvable:$true] %s1830
          %1836 = dma.vmem_to_hbm [thread:$0]  %s1829, 1024, %s1831, %s1802, 128, 128, 8
        $region48: #{multi_head_attention.1} parent=39 // pred_fallthru
          _
      $region40: #{multi_head_attention.1} parent=5 // pred_fallthru
        _
      %p1837 = scmp.le.s32.totalorder 2, %s19
      // Predicated region
      $region49: #{multi_head_attention.1} parent=5 // pred_check
        %p1838 = pneg %p1837
      $region50: #{multi_head_attention.1} parent=5 // pred_check_branch
        %1840 = sbr.rel (%p1838) target = $region52
      $region51: #{multi_head_attention.1} parent=5 // pred_region
        %s1841 = ssub.s32 %s19, 2
        // Predicated region
        $region53: #{multi_head_attention.1} parent=51 // pred_check
          %p1842 = pneg %p158
        $region54: #{multi_head_attention.1} parent=51 // pred_check_branch
          %1844 = sbr.rel (%p1842) target = $region56
        $region55: #{multi_head_attention.1} parent=51 // pred_region
          %s1845 = sand.u32 %s143, 1
          %s1846 = scalar_lea.sflag [#allocation3], %s1845
          %s1847 = sand.u32 %s143, 1
          %s1848 = smul.addr %s1847, 8
          %s1849 = scalar_lea.vmem [#allocation2], %s1848
          %1851 = dma.done %s1846, 128
        $region56: #{multi_head_attention.1} parent=51 // pred_fallthru
          _
        // Predicated region
        $region57: #{multi_head_attention.1} parent=51 // pred_check
          %p1852 = pneg %p184
        $region58: #{multi_head_attention.1} parent=51 // pred_check_branch
          %1854 = sbr.rel (%p1852) target = $region60
        $region59: #{multi_head_attention.1} parent=51 // pred_region
          %s1855 = sand.u32 %s169, 1
          %s1856 = scalar_lea.sflag [#allocation5], %s1855
          %s1857 = sand.u32 %s169, 1
          %s1858 = smul.addr %s1857, 64
          %s1859 = scalar_lea.vmem [#allocation4], %s1858
          %1861 = dma.done %s1856, 1024
        $region60: #{multi_head_attention.1} parent=51 // pred_fallthru
          _
      $region52: #{multi_head_attention.1} parent=5 // pred_fallthru
        _
    $region6: #{multi_head_attention.1} parent=1 // loop_footer
      %s23 = sadd.s32 1, %s19
    $region7: #{multi_head_attention.1} parent=1 // loop_footer_branch
      %18 = sbr.rel target = $region3
    $region8: #{multi_head_attention.1} parent=1 // loop_exit
      _
    %1862 = vsyncpa [#allocation3], 1
    %s1863 = scalar_lea.sflag [#allocation3], 1
    %1864 = vsyncpa %s1863, 1
    %1865 = vsyncpa [#allocation5], 1
    %s1866 = scalar_lea.sflag [#allocation5], 1
    %1867 = vsyncpa %s1866, 1

</llo_original>
